<compile_context>
chip_gen: v5e
topology: v5e:2x2
jax: 0.10.0
libtpu: 0.0.40
codegen_flags: <defaults>
</compile_context>

<pallas_src>
import functools

import jax
import jax.numpy as jnp
from jax import lax
from jax.experimental import pallas as pl
from jax.experimental.pallas import tpu as pltpu


LANE = 128


def _round_up(x, m):
    return (x + m - 1) // m * m


# ------------------------------ fused kernel ------------------------------- #

def _fused_kernel(x_ref, ea_ref, src_ref, dst_ref,
                  wn_ref, we_ref, bm_ref, ws_ref, wa_ref, bh_ref,
                  w1a_ref, w1b_ref, b1_ref, w2_ref, b2_ref,
                  out_ref, h_ref, *, use_bf16):
    """GNN (grid step 0, result kept in VMEM scratch) + per-tile edge classifier."""
    n_pad = x_ref.shape[0]
    e_pad = src_ref.shape[0]
    tile_e = out_ref.shape[0]

    def mm(a, b):
        if use_bf16:
            a = a.astype(jnp.bfloat16)
            b = b.astype(jnp.bfloat16)
        return jnp.dot(a, b, preferred_element_type=jnp.float32)

    # ---------------- GNN: run once, keep h resident in VMEM ---------------- #
    @pl.when(pl.program_id(0) == 0)
    def _gnn():
        x = x_ref[...]                                             # [N_pad, F_pad]
        src = src_ref[...]                                         # [E_pad, 1] int32
        dst = dst_ref[...]                                         # [E_pad, 1] int32
        node_iota = lax.broadcasted_iota(jnp.int32, (e_pad, n_pad), 1)
        src_oh = (node_iota == src).astype(jnp.float32)            # [E_pad, N_pad]
        dst_oh = (node_iota == dst).astype(jnp.float32)            # [E_pad, N_pad]

        x_src = mm(src_oh, x)                                      # gather x[src]
        msg = mm(x_src, wn_ref[...]) + mm(ea_ref[...], we_ref[...]) + bm_ref[...]
        msg = jnp.maximum(msg, 0.0)                                # [E_pad, H_pad]

        # scatter-sum into destination nodes: contract over the edge axis.
        lhs = dst_oh.astype(jnp.bfloat16) if use_bf16 else dst_oh
        rhs = msg.astype(jnp.bfloat16) if use_bf16 else msg
        agg = lax.dot_general(lhs, rhs, (((0,), (0,)), ((), ())),
                              preferred_element_type=jnp.float32)  # [N_pad, H_pad]

        h = mm(x, ws_ref[...]) + mm(agg, wa_ref[...]) + bh_ref[...]
        h_ref[...] = jnp.maximum(h, 0.0)                           # [N_pad, H_pad]

    # ---------------------- edge classifier (per tile) ---------------------- #
    t = pl.program_id(0)
    off = pl.multiple_of(t * tile_e, tile_e)
    src_t = src_ref[pl.ds(off, tile_e), :]                         # [T, 1]
    dst_t = dst_ref[pl.ds(off, tile_e), :]                         # [T, 1]
    tile_iota = lax.broadcasted_iota(jnp.int32, (tile_e, n_pad), 1)
    s_oh = (tile_iota == src_t).astype(jnp.float32)                # [T, N_pad]
    d_oh = (tile_iota == dst_t).astype(jnp.float32)                # [T, N_pad]

    h = h_ref[...]                                                 # [N_pad, H_pad]
    # one stacked gather matmul: [h[src]; h[dst]]  ->  [2T, H_pad]
    gathered = mm(jnp.concatenate([s_oh, d_oh], axis=0), h)

    # folded first layer: two matmuls instead of four
    pa = mm(gathered, w1a_ref[...])                                # [hs@W1a ; hd@W1a]
    pb = mm(gathered, w1b_ref[...])                                # [hs@W1b ; hd@W1b]
    z1 = jnp.maximum(pa[:tile_e] + pb[tile_e:] + b1_ref[...], 0.0)
    z2 = jnp.maximum(pa[tile_e:] + pb[:tile_e] + b1_ref[...], 0.0)

    # folded second layer: o1 + o2 = (z1 + z2) @ Wc2 + 2*b2   (lane-dense slab)
    out_ref[...] = mm(z1 + z2, w2_ref[...]) + 2.0 * b2_ref[...]    # [T, 128]


# ------------------------------ JAX wrapper -------------------------------- #

def combined_edge_model(node_features, edge_list, kites, edge_attr, params,
                        *, tile_e=128, use_bf16=False, interpret=False):
    """Pallas implementation of CombinedEdgeModel.forward (graphlet_type='edge')."""
    del kites  # unused for the 'edge' graphlet type
    N, _ = node_features.shape
    E = edge_list.shape[1]
    H = params["W_self"].shape[1]
    C = params["Wc1a"].shape[1]
    F = node_features.shape[1]
    P = edge_attr.shape[1]

    # pad everything to MXU-friendly shapes (128-lane feature dims, 128-row edge tiles)
    N_pad = _round_up(N, LANE)
    F_pad = _round_up(F, LANE)
    P_pad = _round_up(P, LANE)
    H_pad = _round_up(H, LANE)
    C_pad = _round_up(C, LANE)
    E_pad = _round_up(E, tile_e)
    n_tiles = E_pad // tile_e

    def padr(a, rows, cols):
        a = a.astype(jnp.float32)
        return jnp.pad(a, ((0, rows - a.shape[0]), (0, cols - a.shape[1])))

    x_p = padr(node_features, N_pad, F_pad)
    ea_p = padr(edge_attr, E_pad, P_pad)
    # padded edges use index -1 -> match no node -> contribute nothing anywhere
    src_p = jnp.full((E_pad, 1), -1, jnp.int32).at[:E, 0].set(edge_list[0].astype(jnp.int32))
    dst_p = jnp.full((E_pad, 1), -1, jnp.int32).at[:E, 0].set(edge_list[1].astype(jnp.int32))

    wn = padr(params["W_nbr"], F_pad, H_pad)
    we = padr(params["W_edge"], P_pad, H_pad)
    bm = padr(params["b_msg"], 1, H_pad)
    ws = padr(params["W_self"], F_pad, H_pad)
    wa = padr(params["W_agg"], H_pad, H_pad)
    bh = padr(params["b_node"], 1, H_pad)
    w1a = padr(params["Wc1a"], H_pad, C_pad)
    w1b = padr(params["Wc1b"], H_pad, C_pad)
    b1 = padr(params["bc1"], 1, C_pad)
    w2 = padr(params["Wc2"], C_pad, LANE)      # real output lives in lane 0
    b2 = padr(params["bc2"], 1, LANE)

    operands = (x_p, ea_p, src_p, dst_p,
                wn, we, bm, ws, wa, bh, w1a, w1b, b1, w2, b2)

    # all inputs resident across the edge-tile grid (constant index_maps)
    in_specs = [pl.BlockSpec(a.shape, lambda t: (0, 0)) for a in operands]
    out_spec = pl.BlockSpec((tile_e, LANE), lambda t: (t, 0))      # lane-dense output

    flops = (2 * E_pad * N_pad * F_pad                 # gather x[src]
             + 2 * E_pad * (F_pad + P_pad) * H_pad     # message matmuls
             + 2 * E_pad * N_pad * H_pad               # scatter-sum
             + 2 * N_pad * (F_pad + H_pad) * H_pad     # node update
             + 2 * (2 * E_pad) * N_pad * H_pad         # classifier gathers
             + 2 * 2 * (2 * E_pad) * H_pad * C_pad     # classifier layer 1
             + 2 * E_pad * C_pad * LANE)               # classifier layer 2
    bytes_accessed = (sum(int(a.size) * a.dtype.itemsize for a in operands)
                      + E_pad * LANE * 4)

    out_pad = pl.pallas_call(
        functools.partial(_fused_kernel, use_bf16=use_bf16),
        out_shape=jax.ShapeDtypeStruct((E_pad, LANE), jnp.float32),
        grid_spec=pltpu.PrefetchScalarGridSpec(
            num_scalar_prefetch=0,
            grid=(n_tiles,),
            in_specs=in_specs,
            out_specs=out_spec,
            scratch_shapes=[pltpu.VMEM((N_pad, H_pad), jnp.float32)]),
        compiler_params=pltpu.CompilerParams(
            # h scratch written at step 0 is read by every tile -> serial axis.
            dimension_semantics=("arbitrary",),
            vmem_limit_bytes=48 * 1024 * 1024),
        cost_estimate=pl.CostEstimate(flops=flops, transcendentals=0,
                                      bytes_accessed=bytes_accessed),
        interpret=interpret,
    )(*operands)

    return out_pad[:E, :1]


# --------------------------- pure-JAX reference ----------------------------- #

def reference(node_features, edge_list, edge_attr, p):
    src, dst = edge_list[0], edge_list[1]
    msg = jnp.maximum(node_features[src] @ p["W_nbr"]
                      + edge_attr @ p["W_edge"] + p["b_msg"], 0.0)
    agg = jnp.zeros((node_features.shape[0], msg.shape[1]),
                    jnp.float32).at[dst].add(msg)
    h = jnp.maximum(node_features @ p["W_self"] + agg @ p["W_agg"] + p["b_node"], 0.0)

    Wc1 = jnp.concatenate([p["Wc1a"], p["Wc1b"]], axis=0)   # [2H, C]

    def clf(pairs):                                          # pairs: [E, 2, H]
        z = pairs.reshape(pairs.shape[0], -1)
        return jnp.maximum(z @ Wc1 + p["bc1"], 0.0) @ p["Wc2"] + p["bc2"]

    e1 = h[jnp.stack([src, dst], axis=1)]   # gnn_node_features[edge_list.t()]
    e2 = h[jnp.stack([dst, src], axis=1)]   # gnn_node_features[edge_list.flip(0).t()]
    return clf(e1) + clf(e2)


# ---------------------------------- main ------------------------------------ #

if __name__ == "__main__":
    N, F, E, P = 16, 8, 8, 4      # nodes, node feats, edges, edge feats
    H, C = 16, 8                  # gnn hidden, classifier hidden

    key = jax.random.PRNGKey(0)
    ks = jax.random.split(key, 12)

    node_features = jax.random.normal(ks[0], (N, F), jnp.float32)
    edge_list = jax.random.randint(ks[1], (2, E), 0, N, jnp.int32)
    kites = jax.random.randint(ks[2], (E, 4), 0, N, jnp.int32)   # unused ('edge' type)
    edge_attr = jax.random.normal(ks[3], (E, P), jnp.float32)

    s = 0.1
    params = {
        "W_nbr":  s * jax.random.normal(ks[4],  (F, H), jnp.float32),
        "W_edge": s * jax.random.normal(ks[5],  (P, H), jnp.float32),
        "b_msg":  s * jax.random.normal(ks[6],  (1, H), jnp.float32),
        "W_self": s * jax.random.normal(ks[7],  (F, H), jnp.float32),
        "W_agg":  s * jax.random.normal(ks[8],  (H, H), jnp.float32),
        "b_node": s * jax.random.normal(ks[9],  (1, H), jnp.float32),
        "Wc1a":   s * jax.random.normal(ks[10], (H, C), jnp.float32),
        "Wc1b":   s * jax.random.normal(ks[11], (H, C), jnp.float32),
        "bc1":    jnp.full((1, C), 0.01, jnp.float32),
        "Wc2":    jnp.linspace(-0.1, 0.1, C, dtype=jnp.float32).reshape(C, 1),
        "bc2":    jnp.full((1, 1), 0.02, jnp.float32),
    }

    ref = reference(node_features, edge_list, edge_attr, params)

    # f32 path (exact semantics of the PyTorch module)
    out = combined_edge_model(node_features, edge_list, kites, edge_attr, params)
    out = jax.block_until_ready(out)
    assert out.shape == (E, 1), out.shape
    assert jnp.allclose(out, ref, atol=1e-4, rtol=1e-4), (out, ref)

    # bf16-MXU path (v6e/v7x throughput option): sanity check only
    out_bf16 = combined_edge_model(node_features, edge_list, kites, edge_attr,
                                   params, use_bf16=True)
    out_bf16 = jax.block_until_ready(out_bf16)
    assert jnp.allclose(out_bf16, ref, atol=1e-1, rtol=1e-1), (out_bf16, ref)

    print("KERNEL_OK")
</pallas_src>

<mosaic_0001>
module attributes {stable_mosaic.version = 11 : i64} {
  func.func @_fused_kernel(%arg0: i32, %arg1: memref<128x128xf32, #tpu.memory_space<vmem>>, %arg2: memref<128x128xf32, #tpu.memory_space<vmem>>, %arg3: memref<128x1xi32, #tpu.memory_space<vmem>>, %arg4: memref<128x1xi32, #tpu.memory_space<vmem>>, %arg5: memref<128x128xf32, #tpu.memory_space<vmem>>, %arg6: memref<128x128xf32, #tpu.memory_space<vmem>>, %arg7: memref<1x128xf32, #tpu.memory_space<vmem>>, %arg8: memref<128x128xf32, #tpu.memory_space<vmem>>, %arg9: memref<128x128xf32, #tpu.memory_space<vmem>>, %arg10: memref<1x128xf32, #tpu.memory_space<vmem>>, %arg11: memref<128x128xf32, #tpu.memory_space<vmem>>, %arg12: memref<128x128xf32, #tpu.memory_space<vmem>>, %arg13: memref<1x128xf32, #tpu.memory_space<vmem>>, %arg14: memref<128x128xf32, #tpu.memory_space<vmem>>, %arg15: memref<1x128xf32, #tpu.memory_space<vmem>>, %arg16: memref<128x128xf32, #tpu.memory_space<vmem>>, %arg17: memref<128x128xf32, #tpu.memory_space<vmem>>) attributes {dimension_semantics = [#tpu.dimension_semantics<arbitrary>], iteration_bounds = array<i64: 1>, scalar_prefetch = 0 : i64, scratch_operands = 1 : i64, tpu.core_type = #tpu.core_type<tc>, window_params = [{pipeline_mode = #tpu.pipeline_mode<synchronous>, transform_indices = @transform_0, window_bounds = array<i64: 128, 128>}, {pipeline_mode = #tpu.pipeline_mode<synchronous>, transform_indices = @transform_1, window_bounds = array<i64: 128, 128>}, {pipeline_mode = #tpu.pipeline_mode<synchronous>, transform_indices = @transform_2, window_bounds = array<i64: 128, 1>}, {pipeline_mode = #tpu.pipeline_mode<synchronous>, transform_indices = @transform_3, window_bounds = array<i64: 128, 1>}, {pipeline_mode = #tpu.pipeline_mode<synchronous>, transform_indices = @transform_4, window_bounds = array<i64: 128, 128>}, {pipeline_mode = #tpu.pipeline_mode<synchronous>, transform_indices = @transform_5, window_bounds = array<i64: 128, 128>}, {pipeline_mode = #tpu.pipeline_mode<synchronous>, transform_indices = @transform_6, window_bounds = array<i64: 1, 128>}, {pipeline_mode = #tpu.pipeline_mode<synchronous>, transform_indices = @transform_7, window_bounds = array<i64: 128, 128>}, {pipeline_mode = #tpu.pipeline_mode<synchronous>, transform_indices = @transform_8, window_bounds = array<i64: 128, 128>}, {pipeline_mode = #tpu.pipeline_mode<synchronous>, transform_indices = @transform_9, window_bounds = array<i64: 1, 128>}, {pipeline_mode = #tpu.pipeline_mode<synchronous>, transform_indices = @transform_10, window_bounds = array<i64: 128, 128>}, {pipeline_mode = #tpu.pipeline_mode<synchronous>, transform_indices = @transform_11, window_bounds = array<i64: 128, 128>}, {pipeline_mode = #tpu.pipeline_mode<synchronous>, transform_indices = @transform_12, window_bounds = array<i64: 1, 128>}, {pipeline_mode = #tpu.pipeline_mode<synchronous>, transform_indices = @transform_13, window_bounds = array<i64: 128, 128>}, {pipeline_mode = #tpu.pipeline_mode<synchronous>, transform_indices = @transform_14, window_bounds = array<i64: 1, 128>}, {transform_indices = @transform_15, window_bounds = array<i64: 128, 128>}]} {
    %c0_i32 = arith.constant 0 : i32
    %0 = arith.cmpi eq, %arg0, %c0_i32 : i32
    %1 = arith.extui %0 : i1 to i32
    %c0_i32_0 = arith.constant 0 : i32
    %2 = arith.cmpi ne, %1, %c0_i32_0 : i32
    scf.if %2 {
      %c0_24 = arith.constant 0 : index
      %c0_25 = arith.constant 0 : index
      %50 = vector.load %arg1[%c0_24, %c0_25] : memref<128x128xf32, #tpu.memory_space<vmem>>, vector<128x128xf32>
      %c0_26 = arith.constant 0 : index
      %c0_27 = arith.constant 0 : index
      %51 = vector.load %arg3[%c0_26, %c0_27] : memref<128x1xi32, #tpu.memory_space<vmem>>, vector<128x1xi32>
      %c0_28 = arith.constant 0 : index
      %c0_29 = arith.constant 0 : index
      %52 = vector.load %arg4[%c0_28, %c0_29] : memref<128x1xi32, #tpu.memory_space<vmem>>, vector<128x1xi32>
      %53 = tpu.iota {dimensions = array<i32: 1>} : vector<128x128xi32>
      %54 = vector.broadcast %51 : vector<128x1xi32> to vector<128x128xi32>
      %55 = arith.cmpi eq, %53, %54 : vector<128x128xi32>
      %56 = arith.extui %55 : vector<128x128xi1> to vector<128x128xi32>
      %57 = arith.sitofp %56 : vector<128x128xi32> to vector<128x128xf32>
      %58 = vector.broadcast %52 : vector<128x1xi32> to vector<128x128xi32>
      %59 = arith.cmpi eq, %53, %58 : vector<128x128xi32>
      %60 = arith.extui %59 : vector<128x128xi1> to vector<128x128xi32>
      %61 = arith.sitofp %60 : vector<128x128xi32> to vector<128x128xf32>
      %cst_30 = arith.constant dense<0.000000e+00> : vector<128x128xf32>
      %62 = tpu.matmul %57, %50, %cst_30 {dimension_numbers = #tpu.dot_dimension_numbers<[1], [0], [0], [1], [0, 0, 1, 1], [], []>} : vector<128x128xf32>, vector<128x128xf32>, vector<128x128xf32> -> vector<128x128xf32>
      %c0_31 = arith.constant 0 : index
      %c0_32 = arith.constant 0 : index
      %63 = vector.load %arg5[%c0_31, %c0_32] : memref<128x128xf32, #tpu.memory_space<vmem>>, vector<128x128xf32>
      %cst_33 = arith.constant dense<0.000000e+00> : vector<128x128xf32>
      %64 = tpu.matmul %62, %63, %cst_33 {dimension_numbers = #tpu.dot_dimension_numbers<[1], [0], [0], [1], [0, 0, 1, 1], [], []>} : vector<128x128xf32>, vector<128x128xf32>, vector<128x128xf32> -> vector<128x128xf32>
      %c0_34 = arith.constant 0 : index
      %c0_35 = arith.constant 0 : index
      %65 = vector.load %arg2[%c0_34, %c0_35] : memref<128x128xf32, #tpu.memory_space<vmem>>, vector<128x128xf32>
      %c0_36 = arith.constant 0 : index
      %c0_37 = arith.constant 0 : index
      %66 = vector.load %arg6[%c0_36, %c0_37] : memref<128x128xf32, #tpu.memory_space<vmem>>, vector<128x128xf32>
      %cst_38 = arith.constant dense<0.000000e+00> : vector<128x128xf32>
      %67 = tpu.matmul %65, %66, %cst_38 {dimension_numbers = #tpu.dot_dimension_numbers<[1], [0], [0], [1], [0, 0, 1, 1], [], []>} : vector<128x128xf32>, vector<128x128xf32>, vector<128x128xf32> -> vector<128x128xf32>
      %68 = arith.addf %64, %67 : vector<128x128xf32>
      %c0_39 = arith.constant 0 : index
      %c0_40 = arith.constant 0 : index
      %69 = vector.load %arg7[%c0_39, %c0_40] : memref<1x128xf32, #tpu.memory_space<vmem>>, vector<1x128xf32>
      %70 = vector.broadcast %69 : vector<1x128xf32> to vector<128x128xf32>
      %71 = arith.addf %68, %70 : vector<128x128xf32>
      %cst_41 = arith.constant 0.000000e+00 : f32
      %72 = vector.broadcast %cst_41 : f32 to vector<128x128xf32>
      %73 = arith.maximumf %71, %72 : vector<128x128xf32>
      %cst_42 = arith.constant dense<0.000000e+00> : vector<128x128xf32>
      %74 = tpu.matmul %61, %73, %cst_42 {dimension_numbers = #tpu.dot_dimension_numbers<[0], [0], [1], [1], [0, 1, 1, 1], [], []>} : vector<128x128xf32>, vector<128x128xf32>, vector<128x128xf32> -> vector<128x128xf32>
      %c0_43 = arith.constant 0 : index
      %c0_44 = arith.constant 0 : index
      %75 = vector.load %arg8[%c0_43, %c0_44] : memref<128x128xf32, #tpu.memory_space<vmem>>, vector<128x128xf32>
      %cst_45 = arith.constant dense<0.000000e+00> : vector<128x128xf32>
      %76 = tpu.matmul %50, %75, %cst_45 {dimension_numbers = #tpu.dot_dimension_numbers<[1], [0], [0], [1], [0, 0, 1, 1], [], []>} : vector<128x128xf32>, vector<128x128xf32>, vector<128x128xf32> -> vector<128x128xf32>
      %c0_46 = arith.constant 0 : index
      %c0_47 = arith.constant 0 : index
      %77 = vector.load %arg9[%c0_46, %c0_47] : memref<128x128xf32, #tpu.memory_space<vmem>>, vector<128x128xf32>
      %cst_48 = arith.constant dense<0.000000e+00> : vector<128x128xf32>
      %78 = tpu.matmul %74, %77, %cst_48 {dimension_numbers = #tpu.dot_dimension_numbers<[1], [0], [0], [1], [0, 0, 1, 1], [], []>} : vector<128x128xf32>, vector<128x128xf32>, vector<128x128xf32> -> vector<128x128xf32>
      %79 = arith.addf %76, %78 : vector<128x128xf32>
      %c0_49 = arith.constant 0 : index
      %c0_50 = arith.constant 0 : index
      %80 = vector.load %arg10[%c0_49, %c0_50] : memref<1x128xf32, #tpu.memory_space<vmem>>, vector<1x128xf32>
      %81 = vector.broadcast %80 : vector<1x128xf32> to vector<128x128xf32>
      %82 = arith.addf %79, %81 : vector<128x128xf32>
      %cst_51 = arith.constant 0.000000e+00 : f32
      %83 = vector.broadcast %cst_51 : f32 to vector<128x128xf32>
      %84 = arith.maximumf %82, %83 : vector<128x128xf32>
      %c0_52 = arith.constant 0 : index
      %c0_53 = arith.constant 0 : index
      %85 = vector.load %arg17[%c0_52, %c0_53] : memref<128x128xf32, #tpu.memory_space<vmem>>, vector<128x128xf32>
      tpu.vector_store %arg17[%c0_52, %c0_53], %84 {strides = array<i32>} : memref<128x128xf32, #tpu.memory_space<vmem>>, vector<128x128xf32>,
    } else {
    }
    %c128_i32 = arith.constant 128 : i32
    %3 = arith.muli %arg0, %c128_i32 : i32
    %4 = tpu.assume_multiple %3, 128 : i32
    %5 = arith.index_cast %4 : i32 to index
    %c0 = arith.constant 0 : index
    %6 = vector.load %arg3[%5, %c0] : memref<128x1xi32, #tpu.memory_space<vmem>>, vector<128x1xi32>
    %7 = arith.index_cast %4 : i32 to index
    %c0_1 = arith.constant 0 : index
    %8 = vector.load %arg4[%7, %c0_1] : memref<128x1xi32, #tpu.memory_space<vmem>>, vector<128x1xi32>
    %9 = tpu.iota {dimensions = array<i32: 1>} : vector<128x128xi32>
    %10 = vector.broadcast %6 : vector<128x1xi32> to vector<128x128xi32>
    %11 = arith.cmpi eq, %9, %10 : vector<128x128xi32>
    %12 = arith.extui %11 : vector<128x128xi1> to vector<128x128xi32>
    %13 = arith.sitofp %12 : vector<128x128xi32> to vector<128x128xf32>
    %14 = vector.broadcast %8 : vector<128x1xi32> to vector<128x128xi32>
    %15 = arith.cmpi eq, %9, %14 : vector<128x128xi32>
    %16 = arith.extui %15 : vector<128x128xi1> to vector<128x128xi32>
    %17 = arith.sitofp %16 : vector<128x128xi32> to vector<128x128xf32>
    %c0_2 = arith.constant 0 : index
    %c0_3 = arith.constant 0 : index
    %18 = vector.load %arg17[%c0_2, %c0_3] : memref<128x128xf32, #tpu.memory_space<vmem>>, vector<128x128xf32>
    %19 = tpu.concatenate %13, %17 in 0 : vector<128x128xf32>, vector<128x128xf32> -> vector<256x128xf32>
    %cst = arith.constant dense<0.000000e+00> : vector<256x128xf32>
    %20 = tpu.matmul %19, %18, %cst {dimension_numbers = #tpu.dot_dimension_numbers<[1], [0], [0], [1], [0, 0, 1, 1], [], []>} : vector<256x128xf32>, vector<128x128xf32>, vector<256x128xf32> -> vector<256x128xf32>
    %c0_4 = arith.constant 0 : index
    %c0_5 = arith.constant 0 : index
    %21 = vector.load %arg11[%c0_4, %c0_5] : memref<128x128xf32, #tpu.memory_space<vmem>>, vector<128x128xf32>
    %cst_6 = arith.constant dense<0.000000e+00> : vector<256x128xf32>
    %22 = tpu.matmul %20, %21, %cst_6 {dimension_numbers = #tpu.dot_dimension_numbers<[1], [0], [0], [1], [0, 0, 1, 1], [], []>} : vector<256x128xf32>, vector<128x128xf32>, vector<256x128xf32> -> vector<256x128xf32>
    %c0_7 = arith.constant 0 : index
    %c0_8 = arith.constant 0 : index
    %23 = vector.load %arg12[%c0_7, %c0_8] : memref<128x128xf32, #tpu.memory_space<vmem>>, vector<128x128xf32>
    %cst_9 = arith.constant dense<0.000000e+00> : vector<256x128xf32>
    %24 = tpu.matmul %20, %23, %cst_9 {dimension_numbers = #tpu.dot_dimension_numbers<[1], [0], [0], [1], [0, 0, 1, 1], [], []>} : vector<256x128xf32>, vector<128x128xf32>, vector<256x128xf32> -> vector<256x128xf32>
    %25 = vector.extract_strided_slice %22 {offsets = [0, 0], sizes = [128, 128], strides = [1, 1]} : vector<256x128xf32> to vector<128x128xf32>
    %26 = vector.extract_strided_slice %24 {offsets = [128, 0], sizes = [128, 128], strides = [1, 1]} : vector<256x128xf32> to vector<128x128xf32>
    %27 = arith.addf %25, %26 : vector<128x128xf32>
    %c0_10 = arith.constant 0 : index
    %c0_11 = arith.constant 0 : index
    %28 = vector.load %arg13[%c0_10, %c0_11] : memref<1x128xf32, #tpu.memory_space<vmem>>, vector<1x128xf32>
    %29 = vector.broadcast %28 : vector<1x128xf32> to vector<128x128xf32>
    %30 = arith.addf %27, %29 : vector<128x128xf32>
    %cst_12 = arith.constant 0.000000e+00 : f32
    %31 = vector.broadcast %cst_12 : f32 to vector<128x128xf32>
    %32 = arith.maximumf %30, %31 : vector<128x128xf32>
    %33 = vector.extract_strided_slice %22 {offsets = [128, 0], sizes = [128, 128], strides = [1, 1]} : vector<256x128xf32> to vector<128x128xf32>
    %34 = vector.extract_strided_slice %24 {offsets = [0, 0], sizes = [128, 128], strides = [1, 1]} : vector<256x128xf32> to vector<128x128xf32>
    %35 = arith.addf %33, %34 : vector<128x128xf32>
    %c0_13 = arith.constant 0 : index
    %c0_14 = arith.constant 0 : index
    %36 = vector.load %arg13[%c0_13, %c0_14] : memref<1x128xf32, #tpu.memory_space<vmem>>, vector<1x128xf32>
    %37 = vector.broadcast %36 : vector<1x128xf32> to vector<128x128xf32>
    %38 = arith.addf %35, %37 : vector<128x128xf32>
    %cst_15 = arith.constant 0.000000e+00 : f32
    %39 = vector.broadcast %cst_15 : f32 to vector<128x128xf32>
    %40 = arith.maximumf %38, %39 : vector<128x128xf32>
    %41 = arith.addf %32, %40 : vector<128x128xf32>
    %c0_16 = arith.constant 0 : index
    %c0_17 = arith.constant 0 : index
    %42 = vector.load %arg14[%c0_16, %c0_17] : memref<128x128xf32, #tpu.memory_space<vmem>>, vector<128x128xf32>
    %cst_18 = arith.constant dense<0.000000e+00> : vector<128x128xf32>
    %43 = tpu.matmul %41, %42, %cst_18 {dimension_numbers = #tpu.dot_dimension_numbers<[1], [0], [0], [1], [0, 0, 1, 1], [], []>} : vector<128x128xf32>, vector<128x128xf32>, vector<128x128xf32> -> vector<128x128xf32>
    %c0_19 = arith.constant 0 : index
    %c0_20 = arith.constant 0 : index
    %44 = vector.load %arg15[%c0_19, %c0_20] : memref<1x128xf32, #tpu.memory_space<vmem>>, vector<1x128xf32>
    %cst_21 = arith.constant 2.000000e+00 : f32
    %45 = vector.broadcast %cst_21 : f32 to vector<1x128xf32>
    %46 = arith.mulf %45, %44 : vector<1x128xf32>
    %47 = vector.broadcast %46 : vector<1x128xf32> to vector<128x128xf32>
    %48 = arith.addf %43, %47 : vector<128x128xf32>
    %c0_22 = arith.constant 0 : index
    %c0_23 = arith.constant 0 : index
    %49 = vector.load %arg16[%c0_22, %c0_23] : memref<128x128xf32, #tpu.memory_space<vmem>>, vector<128x128xf32>
    tpu.vector_store %arg16[%c0_22, %c0_23], %48 {strides = array<i32>} : memref<128x128xf32, #tpu.memory_space<vmem>>, vector<128x128xf32>,
    return
  }
  func.func @transform_0(%arg0: i32) -> (i32, i32) {
    %c0_i32 = arith.constant 0 : i32
    %c0_i32_0 = arith.constant 0 : i32
    %c0_i32_1 = arith.constant 0 : i32
    return %c0_i32, %c0_i32_0 : i32, i32
  }
  func.func @transform_1(%arg0: i32) -> (i32, i32) {
    %c0_i32 = arith.constant 0 : i32
    %c0_i32_0 = arith.constant 0 : i32
    %c0_i32_1 = arith.constant 0 : i32
    return %c0_i32, %c0_i32_0 : i32, i32
  }
  func.func @transform_2(%arg0: i32) -> (i32, i32) {
    %c0_i32 = arith.constant 0 : i32
    %c0_i32_0 = arith.constant 0 : i32
    %c0_i32_1 = arith.constant 0 : i32
    return %c0_i32, %c0_i32_0 : i32, i32
  }
  func.func @transform_3(%arg0: i32) -> (i32, i32) {
    %c0_i32 = arith.constant 0 : i32
    %c0_i32_0 = arith.constant 0 : i32
    %c0_i32_1 = arith.constant 0 : i32
    return %c0_i32, %c0_i32_0 : i32, i32
  }
  func.func @transform_4(%arg0: i32) -> (i32, i32) {
    %c0_i32 = arith.constant 0 : i32
    %c0_i32_0 = arith.constant 0 : i32
    %c0_i32_1 = arith.constant 0 : i32
    return %c0_i32, %c0_i32_0 : i32, i32
  }
  func.func @transform_5(%arg0: i32) -> (i32, i32) {
    %c0_i32 = arith.constant 0 : i32
    %c0_i32_0 = arith.constant 0 : i32
    %c0_i32_1 = arith.constant 0 : i32
    return %c0_i32, %c0_i32_0 : i32, i32
  }
  func.func @transform_6(%arg0: i32) -> (i32, i32) {
    %c0_i32 = arith.constant 0 : i32
    %c0_i32_0 = arith.constant 0 : i32
    %c0_i32_1 = arith.constant 0 : i32
    return %c0_i32, %c0_i32_0 : i32, i32
  }
  func.func @transform_7(%arg0: i32) -> (i32, i32) {
    %c0_i32 = arith.constant 0 : i32
    %c0_i32_0 = arith.constant 0 : i32
    %c0_i32_1 = arith.constant 0 : i32
    return %c0_i32, %c0_i32_0 : i32, i32
  }
  func.func @transform_8(%arg0: i32) -> (i32, i32) {
    %c0_i32 = arith.constant 0 : i32
    %c0_i32_0 = arith.constant 0 : i32
    %c0_i32_1 = arith.constant 0 : i32
    return %c0_i32, %c0_i32_0 : i32, i32
  }
  func.func @transform_9(%arg0: i32) -> (i32, i32) {
    %c0_i32 = arith.constant 0 : i32
    %c0_i32_0 = arith.constant 0 : i32
    %c0_i32_1 = arith.constant 0 : i32
    return %c0_i32, %c0_i32_0 : i32, i32
  }
  func.func @transform_10(%arg0: i32) -> (i32, i32) {
    %c0_i32 = arith.constant 0 : i32
    %c0_i32_0 = arith.constant 0 : i32
    %c0_i32_1 = arith.constant 0 : i32
    return %c0_i32, %c0_i32_0 : i32, i32
  }
  func.func @transform_11(%arg0: i32) -> (i32, i32) {
    %c0_i32 = arith.constant 0 : i32
    %c0_i32_0 = arith.constant 0 : i32
    %c0_i32_1 = arith.constant 0 : i32
    return %c0_i32, %c0_i32_0 : i32, i32
  }
  func.func @transform_12(%arg0: i32) -> (i32, i32) {
    %c0_i32 = arith.constant 0 : i32
    %c0_i32_0 = arith.constant 0 : i32
    %c0_i32_1 = arith.constant 0 : i32
    return %c0_i32, %c0_i32_0 : i32, i32
  }
  func.func @transform_13(%arg0: i32) -> (i32, i32) {
    %c0_i32 = arith.constant 0 : i32
    %c0_i32_0 = arith.constant 0 : i32
    %c0_i32_1 = arith.constant 0 : i32
    return %c0_i32, %c0_i32_0 : i32, i32
  }
  func.func @transform_14(%arg0: i32) -> (i32, i32) {
    %c0_i32 = arith.constant 0 : i32
    %c0_i32_0 = arith.constant 0 : i32
    %c0_i32_1 = arith.constant 0 : i32
    return %c0_i32, %c0_i32_0 : i32, i32
  }
  func.func @transform_15(%arg0: i32) -> (i32, i32) {
    %c0_i32 = arith.constant 0 : i32
    %c0_i32_0 = arith.constant 0 : i32
    return %arg0, %c0_i32 : i32, i32
  }
}

</mosaic_0001>

<llo_original>
// kernel: tpu_custom_call.1
$region0: #{tpu_custom_call.1}
  #allocation0 [shape = 'u32[]', space=smem, size = 0x4, offset = 0x4, fixed_abs, tag = 'smem constant byte address 0x4 - core index']
  #allocation1 [shape = 'u32[72,128]{1,0:T(1,128)}', space=vmem, size = 0x9000, scoped, tag = 'internal scratch']
  #allocation2 [shape = 'f32[128,128]{1,0:T(8,128)}', space=vmem, size = 0x10000, scoped, tag = 'scratch operand']
  %s0 = inlined_call_operand.vmem [shape: f32[128,128], index: 0, kind: input, shape index: {}]
  %s1 = inlined_call_operand.vmem [shape: f32[128,128], index: 1, kind: input, shape index: {}]
  %s2 = inlined_call_operand.vmem [shape: s32[128,1], index: 2, kind: input, shape index: {}]
  %s3 = inlined_call_operand.vmem [shape: s32[128,1], index: 3, kind: input, shape index: {}]
  %s4 = inlined_call_operand.hbm [shape: f32[128,128], index: 4, kind: input, shape index: {}]
  %s5 = inlined_call_operand.hbm [shape: f32[128,128], index: 5, kind: input, shape index: {}]
  %s6 = inlined_call_operand.vmem [shape: f32[1,128], index: 6, kind: input, shape index: {}]
  %s7 = inlined_call_operand.hbm [shape: f32[128,128], index: 7, kind: input, shape index: {}]
  %s8 = inlined_call_operand.hbm [shape: f32[128,128], index: 8, kind: input, shape index: {}]
  %s9 = inlined_call_operand.vmem [shape: f32[1,128], index: 9, kind: input, shape index: {}]
  %s10 = inlined_call_operand.hbm [shape: f32[128,128], index: 10, kind: input, shape index: {}]
  %s11 = inlined_call_operand.hbm [shape: f32[128,128], index: 11, kind: input, shape index: {}]
  %s12 = inlined_call_operand.vmem [shape: f32[1,128], index: 12, kind: input, shape index: {}]
  %s13 = inlined_call_operand.hbm [shape: f32[128,128], index: 13, kind: input, shape index: {}]
  %s14 = inlined_call_operand.vmem [shape: f32[1,128], index: 14, kind: input, shape index: {}]
  %s15 = inlined_call_operand.hbm [shape: f32[128,128], index: 15, kind: output, shape index: {}]
  %s16 = sld [smem:[#allocation0]]
  $region102: #{tpu_custom_call.1} parent=0
    _
  %s18 = ssub.s32 1, %s16
  %s19 = scalar_select 0, %s18, %s16
  $region1: #{tpu_custom_call.1} parent=0
    #allocation3 [shape = 'u8[65536]{0}', space=vmem, size = 0x10000, scoped, tag = 'input window, operand 4, single buffered']
    #allocation4 [shape = 's32[1]{0}', space=sflag, size = 0x4, scoped, tag = 'scoped memory for tpu_custom_call.1']
    #allocation5 [shape = 's32[1]{0}', space=sflag, size = 0x4, scoped, tag = 'scoped memory for tpu_custom_call.1']
    #allocation6 [shape = 'u8[65536]{0}', space=vmem, size = 0x10000, scoped, tag = 'input window, operand 5, single buffered']
    #allocation7 [shape = 's32[1]{0}', space=sflag, size = 0x4, scoped, tag = 'scoped memory for tpu_custom_call.1']
    #allocation8 [shape = 'u8[65536]{0}', space=vmem, size = 0x10000, scoped, tag = 'input window, operand 7, single buffered']
    #allocation9 [shape = 'u8[65536]{0}', space=vmem, size = 0x10000, scoped, tag = 'input window, operand 8, single buffered']
    #allocation10 [shape = 's32[1]{0}', space=sflag, size = 0x4, scoped, tag = 'scoped memory for tpu_custom_call.1']
    #allocation11 [shape = 'u8[65536]{0}', space=vmem, size = 0x10000, scoped, tag = 'input window, operand 10, single buffered']
    #allocation12 [shape = 'u8[65536]{0}', space=vmem, size = 0x10000, scoped, tag = 'input window, operand 11, single buffered']
    #allocation13 [shape = 's32[1]{0}', space=sflag, size = 0x4, scoped, tag = 'scoped memory for tpu_custom_call.1']
    #allocation14 [shape = 'u8[65536]{0}', space=vmem, size = 0x10000, scoped, tag = 'input window, operand 13, single buffered']
    #allocation15 [shape = 'u8[65536]{0}', space=vmem, size = 0x10000, scoped, tag = 'output window, operand 0, single buffered']
    %20 = vsyncpa [#allocation4], 0
    %21 = vsyncpa [#allocation7], 0
    %22 = vsyncpa [#allocation10], 0
    %23 = vsyncpa [#allocation13], 0
    %24 = vsyncpa [#allocation5], 0
    // Predicated region
    $region2: #{tpu_custom_call.1} parent=1 // pred_check
      _
    $region3: #{tpu_custom_call.1} parent=1 // pred_check_branch
      %26 = sbr.rel (0) target = $region5
    $region4: #{tpu_custom_call.1} parent=1 // pred_region
      _
    $region5: #{tpu_custom_call.1} parent=1 // pred_fallthru
      _
    // Predicated region
    $region6: #{tpu_custom_call.1} parent=1 // pred_check
      _
    $region7: #{tpu_custom_call.1} parent=1 // pred_check_branch
      %28 = sbr.rel (0) target = $region9
    $region8: #{tpu_custom_call.1} parent=1 // pred_region
      _
    $region9: #{tpu_custom_call.1} parent=1 // pred_fallthru
      _
    // Predicated region
    $region10: #{tpu_custom_call.1} parent=1 // pred_check
      _
    $region11: #{tpu_custom_call.1} parent=1 // pred_check_branch
      %30 = sbr.rel (0) target = $region13
    $region12: #{tpu_custom_call.1} parent=1 // pred_region
      _
    $region13: #{tpu_custom_call.1} parent=1 // pred_fallthru
      _
    // Predicated region
    $region14: #{tpu_custom_call.1} parent=1 // pred_check
      _
    $region15: #{tpu_custom_call.1} parent=1 // pred_check_branch
      %32 = sbr.rel (0) target = $region17
    $region16: #{tpu_custom_call.1} parent=1 // pred_region
      _
    $region17: #{tpu_custom_call.1} parent=1 // pred_fallthru
      _
    // Predicated region
    $region18: #{tpu_custom_call.1} parent=1 // pred_check
      _
    $region19: #{tpu_custom_call.1} parent=1 // pred_check_branch
      %34 = sbr.rel (0) target = $region21
    $region20: #{tpu_custom_call.1} parent=1 // pred_region
      %36 = vsyncadd [#allocation4], 0
      %s37 = sshll.u32 %s4, 4
      %s38 = int_to_ptr.hbm [resolvable:$true] %s37
      %s39 = sshll.u32 [#allocation3], 4
      %s40 = int_to_ptr.vmem [resolvable:$true] %s39
      %45 = dma.hbm_to_vmem [thread:$0]  %s38, 2048, %s40, [#allocation4], 128, 128, 8
    $region21: #{tpu_custom_call.1} parent=1 // pred_fallthru
      _
    // Predicated region
    $region22: #{tpu_custom_call.1} parent=1 // pred_check
      _
    $region23: #{tpu_custom_call.1} parent=1 // pred_check_branch
      %47 = sbr.rel (0) target = $region25
    $region24: #{tpu_custom_call.1} parent=1 // pred_region
      %49 = vsyncadd [#allocation7], 0
      %s50 = sshll.u32 %s5, 4
      %s51 = int_to_ptr.hbm [resolvable:$true] %s50
      %s52 = sshll.u32 [#allocation6], 4
      %s53 = int_to_ptr.vmem [resolvable:$true] %s52
      %58 = dma.hbm_to_vmem [thread:$0]  %s51, 2048, %s53, [#allocation7], 128, 128, 8
    $region25: #{tpu_custom_call.1} parent=1 // pred_fallthru
      _
    // Predicated region
    $region26: #{tpu_custom_call.1} parent=1 // pred_check
      _
    $region27: #{tpu_custom_call.1} parent=1 // pred_check_branch
      %60 = sbr.rel (0) target = $region29
    $region28: #{tpu_custom_call.1} parent=1 // pred_region
      _
    $region29: #{tpu_custom_call.1} parent=1 // pred_fallthru
      _
    // Predicated region
    $region30: #{tpu_custom_call.1} parent=1 // pred_check
      _
    $region31: #{tpu_custom_call.1} parent=1 // pred_check_branch
      %62 = sbr.rel (0) target = $region33
    $region32: #{tpu_custom_call.1} parent=1 // pred_region
      %64 = vsyncadd [#allocation7], 0
      %s65 = sshll.u32 %s7, 4
      %s66 = int_to_ptr.hbm [resolvable:$true] %s65
      %s67 = sshll.u32 [#allocation8], 4
      %s68 = int_to_ptr.vmem [resolvable:$true] %s67
      %73 = dma.hbm_to_vmem [thread:$0]  %s66, 2048, %s68, [#allocation7], 128, 128, 8
    $region33: #{tpu_custom_call.1} parent=1 // pred_fallthru
      _
    // Predicated region
    $region34: #{tpu_custom_call.1} parent=1 // pred_check
      _
    $region35: #{tpu_custom_call.1} parent=1 // pred_check_branch
      %75 = sbr.rel (0) target = $region37
    $region36: #{tpu_custom_call.1} parent=1 // pred_region
      %77 = vsyncadd [#allocation10], 0
      %s78 = sshll.u32 %s8, 4
      %s79 = int_to_ptr.hbm [resolvable:$true] %s78
      %s80 = sshll.u32 [#allocation9], 4
      %s81 = int_to_ptr.vmem [resolvable:$true] %s80
      %86 = dma.hbm_to_vmem [thread:$0]  %s79, 2048, %s81, [#allocation10], 128, 128, 8
    $region37: #{tpu_custom_call.1} parent=1 // pred_fallthru
      _
    // Predicated region
    $region38: #{tpu_custom_call.1} parent=1 // pred_check
      _
    $region39: #{tpu_custom_call.1} parent=1 // pred_check_branch
      %88 = sbr.rel (0) target = $region41
    $region40: #{tpu_custom_call.1} parent=1 // pred_region
      _
    $region41: #{tpu_custom_call.1} parent=1 // pred_fallthru
      _
    // Predicated region
    $region42: #{tpu_custom_call.1} parent=1 // pred_check
      _
    $region43: #{tpu_custom_call.1} parent=1 // pred_check_branch
      %90 = sbr.rel (0) target = $region45
    $region44: #{tpu_custom_call.1} parent=1 // pred_region
      %92 = vsyncadd [#allocation10], 0
      %s93 = sshll.u32 %s10, 4
      %s94 = int_to_ptr.hbm [resolvable:$true] %s93
      %s95 = sshll.u32 [#allocation11], 4
      %s96 = int_to_ptr.vmem [resolvable:$true] %s95
      %101 = dma.hbm_to_vmem [thread:$0]  %s94, 2048, %s96, [#allocation10], 128, 128, 8
    $region45: #{tpu_custom_call.1} parent=1 // pred_fallthru
      _
    // Predicated region
    $region46: #{tpu_custom_call.1} parent=1 // pred_check
      _
    $region47: #{tpu_custom_call.1} parent=1 // pred_check_branch
      %103 = sbr.rel (0) target = $region49
    $region48: #{tpu_custom_call.1} parent=1 // pred_region
      %105 = vsyncadd [#allocation13], 0
      %s106 = sshll.u32 %s11, 4
      %s107 = int_to_ptr.hbm [resolvable:$true] %s106
      %s108 = sshll.u32 [#allocation12], 4
      %s109 = int_to_ptr.vmem [resolvable:$true] %s108
      %114 = dma.hbm_to_vmem [thread:$0]  %s107, 2048, %s109, [#allocation13], 128, 128, 8
    $region49: #{tpu_custom_call.1} parent=1 // pred_fallthru
      _
    // Predicated region
    $region50: #{tpu_custom_call.1} parent=1 // pred_check
      _
    $region51: #{tpu_custom_call.1} parent=1 // pred_check_branch
      %116 = sbr.rel (0) target = $region53
    $region52: #{tpu_custom_call.1} parent=1 // pred_region
      _
    $region53: #{tpu_custom_call.1} parent=1 // pred_fallthru
      _
    // Predicated region
    $region54: #{tpu_custom_call.1} parent=1 // pred_check
      _
    $region55: #{tpu_custom_call.1} parent=1 // pred_check_branch
      %118 = sbr.rel (0) target = $region57
    $region56: #{tpu_custom_call.1} parent=1 // pred_region
      %120 = vsyncadd [#allocation13], 0
      %s121 = sshll.u32 %s13, 4
      %s122 = int_to_ptr.hbm [resolvable:$true] %s121
      %s123 = sshll.u32 [#allocation14], 4
      %s124 = int_to_ptr.vmem [resolvable:$true] %s123
      %129 = dma.hbm_to_vmem [thread:$0]  %s122, 2048, %s124, [#allocation13], 128, 128, 8
    $region57: #{tpu_custom_call.1} parent=1 // pred_fallthru
      _
    // Predicated region
    $region58: #{tpu_custom_call.1} parent=1 // pred_check
      _
    $region59: #{tpu_custom_call.1} parent=1 // pred_check_branch
      %131 = sbr.rel (0) target = $region61
    $region60: #{tpu_custom_call.1} parent=1 // pred_region
      _
    $region61: #{tpu_custom_call.1} parent=1 // pred_fallthru
      _
    // Predicated region
    $region62: #{tpu_custom_call.1} parent=1 // pred_check
      _
    $region63: #{tpu_custom_call.1} parent=1 // pred_check_branch
      %133 = sbr.rel (0) target = $region65
    $region64: #{tpu_custom_call.1} parent=1 // pred_region
      %135 = dma.done [#allocation4], 2048
    $region65: #{tpu_custom_call.1} parent=1 // pred_fallthru
      _
    // Predicated region
    $region66: #{tpu_custom_call.1} parent=1 // pred_check
      _
    $region67: #{tpu_custom_call.1} parent=1 // pred_check_branch
      %137 = sbr.rel (0) target = $region69
    $region68: #{tpu_custom_call.1} parent=1 // pred_region
      %139 = dma.done [#allocation7], 2048
    $region69: #{tpu_custom_call.1} parent=1 // pred_fallthru
      _
    // Predicated region
    $region70: #{tpu_custom_call.1} parent=1 // pred_check
      _
    $region71: #{tpu_custom_call.1} parent=1 // pred_check_branch
      %141 = sbr.rel (0) target = $region73
    $region72: #{tpu_custom_call.1} parent=1 // pred_region
      %143 = dma.done [#allocation7], 2048
    $region73: #{tpu_custom_call.1} parent=1 // pred_fallthru
      _
    // Predicated region
    $region74: #{tpu_custom_call.1} parent=1 // pred_check
      _
    $region75: #{tpu_custom_call.1} parent=1 // pred_check_branch
      %145 = sbr.rel (0) target = $region77
    $region76: #{tpu_custom_call.1} parent=1 // pred_region
      %147 = dma.done [#allocation10], 2048
    $region77: #{tpu_custom_call.1} parent=1 // pred_fallthru
      _
    // Predicated region
    $region78: #{tpu_custom_call.1} parent=1 // pred_check
      _
    $region79: #{tpu_custom_call.1} parent=1 // pred_check_branch
      %149 = sbr.rel (0) target = $region81
    $region80: #{tpu_custom_call.1} parent=1 // pred_region
      %151 = dma.done [#allocation10], 2048
    $region81: #{tpu_custom_call.1} parent=1 // pred_fallthru
      _
    // Predicated region
    $region82: #{tpu_custom_call.1} parent=1 // pred_check
      _
    $region83: #{tpu_custom_call.1} parent=1 // pred_check_branch
      %153 = sbr.rel (0) target = $region85
    $region84: #{tpu_custom_call.1} parent=1 // pred_region
      %155 = dma.done [#allocation13], 2048
    $region85: #{tpu_custom_call.1} parent=1 // pred_fallthru
      _
    // Predicated region
    $region86: #{tpu_custom_call.1} parent=1 // pred_check
      _
    $region87: #{tpu_custom_call.1} parent=1 // pred_check_branch
      %157 = sbr.rel (0) target = $region89
    $region88: #{tpu_custom_call.1} parent=1 // pred_region
      %159 = dma.done [#allocation13], 2048
    $region89: #{tpu_custom_call.1} parent=1 // pred_fallthru
      _
    %p160 = scmp.eq.s32.totalorder 0, 0
    // Predicated region
    $region90: #{tpu_custom_call.1} parent=1 // pred_check
      %p161 = pneg %p160
    $region91: #{tpu_custom_call.1} parent=1 // pred_check_branch
      %163 = sbr.rel (%p161) target = $region93
    $region92: #{tpu_custom_call.1} parent=1 // pred_region
      %v164 = vld [vmem:[%s0] sm:$0xff]
      %v165 = vld [vmem:[%s0 + $0x8] sm:$0xff]
      %v166 = vld [vmem:[%s0 + $0x10] sm:$0xff]
      %v167 = vld [vmem:[%s0 + $0x18] sm:$0xff]
      %v168 = vld [vmem:[%s0 + $0x20] sm:$0xff]
      %v169 = vld [vmem:[%s0 + $0x28] sm:$0xff]
      %v170 = vld [vmem:[%s0 + $0x30] sm:$0xff]
      %v171 = vld [vmem:[%s0 + $0x38] sm:$0xff]
      %v172 = vld [vmem:[%s0 + $0x40] sm:$0xff]
      %v173 = vld [vmem:[%s0 + $0x48] sm:$0xff]
      %v174 = vld [vmem:[%s0 + $0x50] sm:$0xff]
      %v175 = vld [vmem:[%s0 + $0x58] sm:$0xff]
      %v176 = vld [vmem:[%s0 + $0x60] sm:$0xff]
      %v177 = vld [vmem:[%s0 + $0x68] sm:$0xff]
      %v178 = vld [vmem:[%s0 + $0x70] sm:$0xff]
      %v179 = vld [vmem:[%s0 + $0x78] sm:$0xff]
      %v180 = vld [vmem:[%s2] sm:$0xff]
      %v181 = vld [vmem:[%s2 + $0x8] sm:$0xff]
      %v182 = vld [vmem:[%s2 + $0x10] sm:$0xff]
      %v183 = vld [vmem:[%s2 + $0x18] sm:$0xff]
      %v184 = vld [vmem:[%s2 + $0x20] sm:$0xff]
      %v185 = vld [vmem:[%s2 + $0x28] sm:$0xff]
      %v186 = vld [vmem:[%s2 + $0x30] sm:$0xff]
      %v187 = vld [vmem:[%s2 + $0x38] sm:$0xff]
      %v188 = vld [vmem:[%s2 + $0x40] sm:$0xff]
      %v189 = vld [vmem:[%s2 + $0x48] sm:$0xff]
      %v190 = vld [vmem:[%s2 + $0x50] sm:$0xff]
      %v191 = vld [vmem:[%s2 + $0x58] sm:$0xff]
      %v192 = vld [vmem:[%s2 + $0x60] sm:$0xff]
      %v193 = vld [vmem:[%s2 + $0x68] sm:$0xff]
      %v194 = vld [vmem:[%s2 + $0x70] sm:$0xff]
      %v195 = vld [vmem:[%s2 + $0x78] sm:$0xff]
      %v196 = vld [vmem:[%s3] sm:$0xff]
      %v197 = vld [vmem:[%s3 + $0x8] sm:$0xff]
      %v198 = vld [vmem:[%s3 + $0x10] sm:$0xff]
      %v199 = vld [vmem:[%s3 + $0x18] sm:$0xff]
      %v200 = vld [vmem:[%s3 + $0x20] sm:$0xff]
      %v201 = vld [vmem:[%s3 + $0x28] sm:$0xff]
      %v202 = vld [vmem:[%s3 + $0x30] sm:$0xff]
      %v203 = vld [vmem:[%s3 + $0x38] sm:$0xff]
      %v204 = vld [vmem:[%s3 + $0x40] sm:$0xff]
      %v205 = vld [vmem:[%s3 + $0x48] sm:$0xff]
      %v206 = vld [vmem:[%s3 + $0x50] sm:$0xff]
      %v207 = vld [vmem:[%s3 + $0x58] sm:$0xff]
      %v208 = vld [vmem:[%s3 + $0x60] sm:$0xff]
      %v209 = vld [vmem:[%s3 + $0x68] sm:$0xff]
      %v210 = vld [vmem:[%s3 + $0x70] sm:$0xff]
      %v211 = vld [vmem:[%s3 + $0x78] sm:$0xff]
      %v212 = vlaneseq
      %v213 = vand.u32 %v212, 127
      %214 = vset.pattern.permute.xlu0 0
      %215 = vperm.xlu0 %214, %v180
      %v216 = vpop.permute.xlu0 %215
      %217 = vset.pattern.permute.xlu0 0
      %218 = vperm.xlu0 %217, %v181
      %v219 = vpop.permute.xlu0 %218
      %220 = vset.pattern.permute.xlu0 0
      %221 = vperm.xlu0 %220, %v182
      %v222 = vpop.permute.xlu0 %221
      %223 = vset.pattern.permute.xlu0 0
      %224 = vperm.xlu0 %223, %v183
      %v225 = vpop.permute.xlu0 %224
      %226 = vset.pattern.permute.xlu0 0
      %227 = vperm.xlu0 %226, %v184
      %v228 = vpop.permute.xlu0 %227
      %229 = vset.pattern.permute.xlu0 0
      %230 = vperm.xlu0 %229, %v185
      %v231 = vpop.permute.xlu0 %230
      %232 = vset.pattern.permute.xlu0 0
      %233 = vperm.xlu0 %232, %v186
      %v234 = vpop.permute.xlu0 %233
      %235 = vset.pattern.permute.xlu0 0
      %236 = vperm.xlu0 %235, %v187
      %v237 = vpop.permute.xlu0 %236
      %238 = vset.pattern.permute.xlu0 0
      %239 = vperm.xlu0 %238, %v188
      %v240 = vpop.permute.xlu0 %239
      %241 = vset.pattern.permute.xlu0 0
      %242 = vperm.xlu0 %241, %v189
      %v243 = vpop.permute.xlu0 %242
      %244 = vset.pattern.permute.xlu0 0
      %245 = vperm.xlu0 %244, %v190
      %v246 = vpop.permute.xlu0 %245
      %247 = vset.pattern.permute.xlu0 0
      %248 = vperm.xlu0 %247, %v191
      %v249 = vpop.permute.xlu0 %248
      %250 = vset.pattern.permute.xlu0 0
      %251 = vperm.xlu0 %250, %v192
      %v252 = vpop.permute.xlu0 %251
      %253 = vset.pattern.permute.xlu0 0
      %254 = vperm.xlu0 %253, %v193
      %v255 = vpop.permute.xlu0 %254
      %256 = vset.pattern.permute.xlu0 0
      %257 = vperm.xlu0 %256, %v194
      %v258 = vpop.permute.xlu0 %257
      %259 = vset.pattern.permute.xlu0 0
      %260 = vperm.xlu0 %259, %v195
      %v261 = vpop.permute.xlu0 %260
      %vm262 = vcmp.eq.s32.totalorder %v213, %v216
      %vm263 = vcmp.eq.s32.totalorder %v213, %v219
      %vm264 = vcmp.eq.s32.totalorder %v213, %v222
      %vm265 = vcmp.eq.s32.totalorder %v213, %v225
      %vm266 = vcmp.eq.s32.totalorder %v213, %v228
      %vm267 = vcmp.eq.s32.totalorder %v213, %v231
      %vm268 = vcmp.eq.s32.totalorder %v213, %v234
      %vm269 = vcmp.eq.s32.totalorder %v213, %v237
      %vm270 = vcmp.eq.s32.totalorder %v213, %v240
      %vm271 = vcmp.eq.s32.totalorder %v213, %v243
      %vm272 = vcmp.eq.s32.totalorder %v213, %v246
      %vm273 = vcmp.eq.s32.totalorder %v213, %v249
      %vm274 = vcmp.eq.s32.totalorder %v213, %v252
      %vm275 = vcmp.eq.s32.totalorder %v213, %v255
      %vm276 = vcmp.eq.s32.totalorder %v213, %v258
      %vm277 = vcmp.eq.s32.totalorder %v213, %v261
      %v278 = vsel %vm262, 1, 0
      %v279 = vsel %vm263, 1, 0
      %v280 = vsel %vm264, 1, 0
      %v281 = vsel %vm265, 1, 0
      %v282 = vsel %vm266, 1, 0
      %v283 = vsel %vm267, 1, 0
      %v284 = vsel %vm268, 1, 0
      %v285 = vsel %vm269, 1, 0
      %v286 = vsel %vm270, 1, 0
      %v287 = vsel %vm271, 1, 0
      %v288 = vsel %vm272, 1, 0
      %v289 = vsel %vm273, 1, 0
      %v290 = vsel %vm274, 1, 0
      %v291 = vsel %vm275, 1, 0
      %v292 = vsel %vm276, 1, 0
      %v293 = vsel %vm277, 1, 0
      %v294 = vcvt.s32.f32 %v278
      %v295 = vcvt.s32.f32 %v279
      %v296 = vcvt.s32.f32 %v280
      %v297 = vcvt.s32.f32 %v281
      %v298 = vcvt.s32.f32 %v282
      %v299 = vcvt.s32.f32 %v283
      %v300 = vcvt.s32.f32 %v284
      %v301 = vcvt.s32.f32 %v285
      %v302 = vcvt.s32.f32 %v286
      %v303 = vcvt.s32.f32 %v287
      %v304 = vcvt.s32.f32 %v288
      %v305 = vcvt.s32.f32 %v289
      %v306 = vcvt.s32.f32 %v290
      %v307 = vcvt.s32.f32 %v291
      %v308 = vcvt.s32.f32 %v292
      %v309 = vcvt.s32.f32 %v293
      %310 = vset.pattern.permute.xlu0 0
      %311 = vperm.xlu0 %310, %v196
      %v312 = vpop.permute.xlu0 %311
      %313 = vset.pattern.permute.xlu0 0
      %314 = vperm.xlu0 %313, %v197
      %v315 = vpop.permute.xlu0 %314
      %316 = vset.pattern.permute.xlu0 0
      %317 = vperm.xlu0 %316, %v198
      %v318 = vpop.permute.xlu0 %317
      %319 = vset.pattern.permute.xlu0 0
      %320 = vperm.xlu0 %319, %v199
      %v321 = vpop.permute.xlu0 %320
      %322 = vset.pattern.permute.xlu0 0
      %323 = vperm.xlu0 %322, %v200
      %v324 = vpop.permute.xlu0 %323
      %325 = vset.pattern.permute.xlu0 0
      %326 = vperm.xlu0 %325, %v201
      %v327 = vpop.permute.xlu0 %326
      %328 = vset.pattern.permute.xlu0 0
      %329 = vperm.xlu0 %328, %v202
      %v330 = vpop.permute.xlu0 %329
      %331 = vset.pattern.permute.xlu0 0
      %332 = vperm.xlu0 %331, %v203
      %v333 = vpop.permute.xlu0 %332
      %334 = vset.pattern.permute.xlu0 0
      %335 = vperm.xlu0 %334, %v204
      %v336 = vpop.permute.xlu0 %335
      %337 = vset.pattern.permute.xlu0 0
      %338 = vperm.xlu0 %337, %v205
      %v339 = vpop.permute.xlu0 %338
      %340 = vset.pattern.permute.xlu0 0
      %341 = vperm.xlu0 %340, %v206
      %v342 = vpop.permute.xlu0 %341
      %343 = vset.pattern.permute.xlu0 0
      %344 = vperm.xlu0 %343, %v207
      %v345 = vpop.permute.xlu0 %344
      %346 = vset.pattern.permute.xlu0 0
      %347 = vperm.xlu0 %346, %v208
      %v348 = vpop.permute.xlu0 %347
      %349 = vset.pattern.permute.xlu0 0
      %350 = vperm.xlu0 %349, %v209
      %v351 = vpop.permute.xlu0 %350
      %352 = vset.pattern.permute.xlu0 0
      %353 = vperm.xlu0 %352, %v210
      %v354 = vpop.permute.xlu0 %353
      %355 = vset.pattern.permute.xlu0 0
      %356 = vperm.xlu0 %355, %v211
      %v357 = vpop.permute.xlu0 %356
      %vm358 = vcmp.eq.s32.totalorder %v213, %v312
      %vm359 = vcmp.eq.s32.totalorder %v213, %v315
      %vm360 = vcmp.eq.s32.totalorder %v213, %v318
      %vm361 = vcmp.eq.s32.totalorder %v213, %v321
      %vm362 = vcmp.eq.s32.totalorder %v213, %v324
      %vm363 = vcmp.eq.s32.totalorder %v213, %v327
      %vm364 = vcmp.eq.s32.totalorder %v213, %v330
      %vm365 = vcmp.eq.s32.totalorder %v213, %v333
      %vm366 = vcmp.eq.s32.totalorder %v213, %v336
      %vm367 = vcmp.eq.s32.totalorder %v213, %v339
      %vm368 = vcmp.eq.s32.totalorder %v213, %v342
      %vm369 = vcmp.eq.s32.totalorder %v213, %v345
      %vm370 = vcmp.eq.s32.totalorder %v213, %v348
      %vm371 = vcmp.eq.s32.totalorder %v213, %v351
      %vm372 = vcmp.eq.s32.totalorder %v213, %v354
      %vm373 = vcmp.eq.s32.totalorder %v213, %v357
      %v374 = vsel %vm358, 1, 0
      %v375 = vsel %vm359, 1, 0
      %v376 = vsel %vm360, 1, 0
      %v377 = vsel %vm361, 1, 0
      %v378 = vsel %vm362, 1, 0
      %v379 = vsel %vm363, 1, 0
      %v380 = vsel %vm364, 1, 0
      %v381 = vsel %vm365, 1, 0
      %v382 = vsel %vm366, 1, 0
      %v383 = vsel %vm367, 1, 0
      %v384 = vsel %vm368, 1, 0
      %v385 = vsel %vm369, 1, 0
      %v386 = vsel %vm370, 1, 0
      %v387 = vsel %vm371, 1, 0
      %v388 = vsel %vm372, 1, 0
      %v389 = vsel %vm373, 1, 0
      %v390 = vcvt.s32.f32 %v374
      %v391 = vcvt.s32.f32 %v375
      %v392 = vcvt.s32.f32 %v376
      %v393 = vcvt.s32.f32 %v377
      %v394 = vcvt.s32.f32 %v378
      %v395 = vcvt.s32.f32 %v379
      %v396 = vcvt.s32.f32 %v380
      %v397 = vcvt.s32.f32 %v381
      %v398 = vcvt.s32.f32 %v382
      %v399 = vcvt.s32.f32 %v383
      %v400 = vcvt.s32.f32 %v384
      %v401 = vcvt.s32.f32 %v385
      %v402 = vcvt.s32.f32 %v386
      %v403 = vcvt.s32.f32 %v387
      %v404 = vcvt.s32.f32 %v388
      %v405 = vcvt.s32.f32 %v389
      %406 = vmatpush.msra.mxu0 %v179
      %407 = vmatpush.msra.mxu0 %v178
      %408 = vmatpush.msra.mxu0 %v177
      %409 = vmatpush.msra.mxu0 %v176
      %410 = vmatpush.msra.mxu0 %v175
      %411 = vmatpush.msra.mxu0 %v174
      %412 = vmatpush.msra.mxu0 %v173
      %413 = vmatpush.msra.mxu0 %v172
      %414 = vmatpush.msra.mxu0 %v171
      %415 = vmatpush.msra.mxu0 %v170
      %416 = vmatpush.msra.mxu0 %v169
      %417 = vmatpush.msra.mxu0 %v168
      %418 = vmatpush.msra.mxu0 %v167
      %419 = vmatpush.msra.mxu0 %v166
      %420 = vmatpush.msra.mxu0 %v165
      %421 = vmatpush.msra.mxu0 %v164
      %422 = vmatmul.f32.gmra.mxu0 %v294
      %v423 = vpop.f32.mrf.mxu0
      %v424 = vadd.f32 0.0, %v423
      %425 = vmatmul.f32.gmra.mxu0 %v295
      %v426 = vpop.f32.mrf.mxu0
      %v427 = vadd.f32 0.0, %v426
      %428 = vmatmul.f32.gmra.mxu0 %v296
      %v429 = vpop.f32.mrf.mxu0
      %v430 = vadd.f32 0.0, %v429
      %431 = vmatmul.f32.gmra.mxu0 %v297
      %v432 = vpop.f32.mrf.mxu0
      %v433 = vadd.f32 0.0, %v432
      %434 = vmatmul.f32.gmra.mxu0 %v298
      %v435 = vpop.f32.mrf.mxu0
      %v436 = vadd.f32 0.0, %v435
      %437 = vmatmul.f32.gmra.mxu0 %v299
      %v438 = vpop.f32.mrf.mxu0
      %v439 = vadd.f32 0.0, %v438
      %440 = vmatmul.f32.gmra.mxu0 %v300
      %v441 = vpop.f32.mrf.mxu0
      %v442 = vadd.f32 0.0, %v441
      %443 = vmatmul.f32.gmra.mxu0 %v301
      %v444 = vpop.f32.mrf.mxu0
      %v445 = vadd.f32 0.0, %v444
      %446 = vmatmul.f32.gmra.mxu0 %v302
      %v447 = vpop.f32.mrf.mxu0
      %v448 = vadd.f32 0.0, %v447
      %449 = vmatmul.f32.gmra.mxu0 %v303
      %v450 = vpop.f32.mrf.mxu0
      %v451 = vadd.f32 0.0, %v450
      %452 = vmatmul.f32.gmra.mxu0 %v304
      %v453 = vpop.f32.mrf.mxu0
      %v454 = vadd.f32 0.0, %v453
      %455 = vmatmul.f32.gmra.mxu0 %v305
      %v456 = vpop.f32.mrf.mxu0
      %v457 = vadd.f32 0.0, %v456
      %458 = vmatmul.f32.gmra.mxu0 %v306
      %v459 = vpop.f32.mrf.mxu0
      %v460 = vadd.f32 0.0, %v459
      %461 = vmatmul.f32.gmra.mxu0 %v307
      %v462 = vpop.f32.mrf.mxu0
      %v463 = vadd.f32 0.0, %v462
      %464 = vmatmul.f32.gmra.mxu0 %v308
      %v465 = vpop.f32.mrf.mxu0
      %v466 = vadd.f32 0.0, %v465
      %467 = vmatmul.f32.gmra.mxu0 %v309
      %v468 = vpop.f32.mrf.mxu0
      %v469 = vadd.f32 0.0, %v468
      %470 = vdwg.mxu0
      %v471 = vld [vmem:[#allocation3] sm:$0xff]
      %v472 = vld [vmem:[#allocation3 + $0x8] sm:$0xff]
      %v473 = vld [vmem:[#allocation3 + $0x10] sm:$0xff]
      %v474 = vld [vmem:[#allocation3 + $0x18] sm:$0xff]
      %v475 = vld [vmem:[#allocation3 + $0x20] sm:$0xff]
      %v476 = vld [vmem:[#allocation3 + $0x28] sm:$0xff]
      %v477 = vld [vmem:[#allocation3 + $0x30] sm:$0xff]
      %v478 = vld [vmem:[#allocation3 + $0x38] sm:$0xff]
      %v479 = vld [vmem:[#allocation3 + $0x40] sm:$0xff]
      %v480 = vld [vmem:[#allocation3 + $0x48] sm:$0xff]
      %v481 = vld [vmem:[#allocation3 + $0x50] sm:$0xff]
      %v482 = vld [vmem:[#allocation3 + $0x58] sm:$0xff]
      %v483 = vld [vmem:[#allocation3 + $0x60] sm:$0xff]
      %v484 = vld [vmem:[#allocation3 + $0x68] sm:$0xff]
      %v485 = vld [vmem:[#allocation3 + $0x70] sm:$0xff]
      %v486 = vld [vmem:[#allocation3 + $0x78] sm:$0xff]
      %v487 = vld [vmem:[%s1] sm:$0xff]
      %v488 = vld [vmem:[%s1 + $0x8] sm:$0xff]
      %v489 = vld [vmem:[%s1 + $0x10] sm:$0xff]
      %v490 = vld [vmem:[%s1 + $0x18] sm:$0xff]
      %v491 = vld [vmem:[%s1 + $0x20] sm:$0xff]
      %v492 = vld [vmem:[%s1 + $0x28] sm:$0xff]
      %v493 = vld [vmem:[%s1 + $0x30] sm:$0xff]
      %v494 = vld [vmem:[%s1 + $0x38] sm:$0xff]
      %v495 = vld [vmem:[%s1 + $0x40] sm:$0xff]
      %v496 = vld [vmem:[%s1 + $0x48] sm:$0xff]
      %v497 = vld [vmem:[%s1 + $0x50] sm:$0xff]
      %v498 = vld [vmem:[%s1 + $0x58] sm:$0xff]
      %v499 = vld [vmem:[%s1 + $0x60] sm:$0xff]
      %v500 = vld [vmem:[%s1 + $0x68] sm:$0xff]
      %v501 = vld [vmem:[%s1 + $0x70] sm:$0xff]
      %v502 = vld [vmem:[%s1 + $0x78] sm:$0xff]
      %v503 = vld [vmem:[#allocation6] sm:$0xff]
      %v504 = vld [vmem:[#allocation6 + $0x8] sm:$0xff]
      %v505 = vld [vmem:[#allocation6 + $0x10] sm:$0xff]
      %v506 = vld [vmem:[#allocation6 + $0x18] sm:$0xff]
      %v507 = vld [vmem:[#allocation6 + $0x20] sm:$0xff]
      %v508 = vld [vmem:[#allocation6 + $0x28] sm:$0xff]
      %v509 = vld [vmem:[#allocation6 + $0x30] sm:$0xff]
      %v510 = vld [vmem:[#allocation6 + $0x38] sm:$0xff]
      %v511 = vld [vmem:[#allocation6 + $0x40] sm:$0xff]
      %v512 = vld [vmem:[#allocation6 + $0x48] sm:$0xff]
      %v513 = vld [vmem:[#allocation6 + $0x50] sm:$0xff]
      %v514 = vld [vmem:[#allocation6 + $0x58] sm:$0xff]
      %v515 = vld [vmem:[#allocation6 + $0x60] sm:$0xff]
      %v516 = vld [vmem:[#allocation6 + $0x68] sm:$0xff]
      %v517 = vld [vmem:[#allocation6 + $0x70] sm:$0xff]
      %v518 = vld [vmem:[#allocation6 + $0x78] sm:$0xff]
      %519 = vmatpush.msra.mxu0 %v518
      %520 = vmatpush.msra.mxu0 %v517
      %521 = vmatpush.msra.mxu0 %v516
      %522 = vmatpush.msra.mxu0 %v515
      %523 = vmatpush.msra.mxu0 %v514
      %524 = vmatpush.msra.mxu0 %v513
      %525 = vmatpush.msra.mxu0 %v512
      %526 = vmatpush.msra.mxu0 %v511
      %527 = vmatpush.msra.mxu0 %v510
      %528 = vmatpush.msra.mxu0 %v509
      %529 = vmatpush.msra.mxu0 %v508
      %530 = vmatpush.msra.mxu0 %v507
      %531 = vmatpush.msra.mxu0 %v506
      %532 = vmatpush.msra.mxu0 %v505
      %533 = vmatpush.msra.mxu0 %v504
      %534 = vmatpush.msra.mxu0 %v503
      %535 = vmatmul.f32.gmra.mxu0 %v487
      %v536 = vpop.f32.mrf.mxu0
      %v537 = vadd.f32 0.0, %v536
      %538 = vmatmul.f32.gmra.mxu0 %v488
      %v539 = vpop.f32.mrf.mxu0
      %v540 = vadd.f32 0.0, %v539
      %541 = vmatmul.f32.gmra.mxu0 %v489
      %v542 = vpop.f32.mrf.mxu0
      %v543 = vadd.f32 0.0, %v542
      %544 = vmatmul.f32.gmra.mxu0 %v490
      %v545 = vpop.f32.mrf.mxu0
      %v546 = vadd.f32 0.0, %v545
      %547 = vmatmul.f32.gmra.mxu0 %v491
      %v548 = vpop.f32.mrf.mxu0
      %v549 = vadd.f32 0.0, %v548
      %550 = vmatmul.f32.gmra.mxu0 %v492
      %v551 = vpop.f32.mrf.mxu0
      %v552 = vadd.f32 0.0, %v551
      %553 = vmatmul.f32.gmra.mxu0 %v493
      %v554 = vpop.f32.mrf.mxu0
      %v555 = vadd.f32 0.0, %v554
      %556 = vmatmul.f32.gmra.mxu0 %v494
      %v557 = vpop.f32.mrf.mxu0
      %v558 = vadd.f32 0.0, %v557
      %559 = vmatmul.f32.gmra.mxu0 %v495
      %v560 = vpop.f32.mrf.mxu0
      %v561 = vadd.f32 0.0, %v560
      %562 = vmatmul.f32.gmra.mxu0 %v496
      %v563 = vpop.f32.mrf.mxu0
      %v564 = vadd.f32 0.0, %v563
      %565 = vmatmul.f32.gmra.mxu0 %v497
      %v566 = vpop.f32.mrf.mxu0
      %v567 = vadd.f32 0.0, %v566
      %568 = vmatmul.f32.gmra.mxu0 %v498
      %v569 = vpop.f32.mrf.mxu0
      %v570 = vadd.f32 0.0, %v569
      %571 = vmatmul.f32.gmra.mxu0 %v499
      %v572 = vpop.f32.mrf.mxu0
      %v573 = vadd.f32 0.0, %v572
      %574 = vmatmul.f32.gmra.mxu0 %v500
      %v575 = vpop.f32.mrf.mxu0
      %v576 = vadd.f32 0.0, %v575
      %577 = vmatmul.f32.gmra.mxu0 %v501
      %v578 = vpop.f32.mrf.mxu0
      %v579 = vadd.f32 0.0, %v578
      %580 = vmatmul.f32.gmra.mxu0 %v502
      %v581 = vpop.f32.mrf.mxu0
      %v582 = vadd.f32 0.0, %v581
      %583 = vdwg.mxu0
      %584 = vmatpush.msra.mxu0 %v486
      %585 = vmatpush.msra.mxu0 %v485
      %586 = vmatpush.msra.mxu0 %v484
      %587 = vmatpush.msra.mxu0 %v483
      %588 = vmatpush.msra.mxu0 %v482
      %589 = vmatpush.msra.mxu0 %v481
      %590 = vmatpush.msra.mxu0 %v480
      %591 = vmatpush.msra.mxu0 %v479
      %592 = vmatpush.msra.mxu0 %v478
      %593 = vmatpush.msra.mxu0 %v477
      %594 = vmatpush.msra.mxu0 %v476
      %595 = vmatpush.msra.mxu0 %v475
      %596 = vmatpush.msra.mxu0 %v474
      %597 = vmatpush.msra.mxu0 %v473
      %598 = vmatpush.msra.mxu0 %v472
      %599 = vmatpush.msra.mxu0 %v471
      %600 = vmatmul.f32.gmra.mxu0 %v424
      %v601 = vpop.f32.mrf.mxu0
      %v602 = vadd.f32 %v537, %v601
      %603 = vmatmul.f32.gmra.mxu0 %v427
      %v604 = vpop.f32.mrf.mxu0
      %v605 = vadd.f32 %v540, %v604
      %606 = vmatmul.f32.gmra.mxu0 %v430
      %v607 = vpop.f32.mrf.mxu0
      %v608 = vadd.f32 %v543, %v607
      %609 = vmatmul.f32.gmra.mxu0 %v433
      %v610 = vpop.f32.mrf.mxu0
      %v611 = vadd.f32 %v546, %v610
      %612 = vmatmul.f32.gmra.mxu0 %v436
      %v613 = vpop.f32.mrf.mxu0
      %v614 = vadd.f32 %v549, %v613
      %615 = vmatmul.f32.gmra.mxu0 %v439
      %v616 = vpop.f32.mrf.mxu0
      %v617 = vadd.f32 %v552, %v616
      %618 = vmatmul.f32.gmra.mxu0 %v442
      %v619 = vpop.f32.mrf.mxu0
      %v620 = vadd.f32 %v555, %v619
      %621 = vmatmul.f32.gmra.mxu0 %v445
      %v622 = vpop.f32.mrf.mxu0
      %v623 = vadd.f32 %v558, %v622
      %624 = vmatmul.f32.gmra.mxu0 %v448
      %v625 = vpop.f32.mrf.mxu0
      %v626 = vadd.f32 %v561, %v625
      %627 = vmatmul.f32.gmra.mxu0 %v451
      %v628 = vpop.f32.mrf.mxu0
      %v629 = vadd.f32 %v564, %v628
      %630 = vmatmul.f32.gmra.mxu0 %v454
      %v631 = vpop.f32.mrf.mxu0
      %v632 = vadd.f32 %v567, %v631
      %633 = vmatmul.f32.gmra.mxu0 %v457
      %v634 = vpop.f32.mrf.mxu0
      %v635 = vadd.f32 %v570, %v634
      %636 = vmatmul.f32.gmra.mxu0 %v460
      %v637 = vpop.f32.mrf.mxu0
      %v638 = vadd.f32 %v573, %v637
      %639 = vmatmul.f32.gmra.mxu0 %v463
      %v640 = vpop.f32.mrf.mxu0
      %v641 = vadd.f32 %v576, %v640
      %642 = vmatmul.f32.gmra.mxu0 %v466
      %v643 = vpop.f32.mrf.mxu0
      %v644 = vadd.f32 %v579, %v643
      %645 = vmatmul.f32.gmra.mxu0 %v469
      %v646 = vpop.f32.mrf.mxu0
      %v647 = vadd.f32 %v582, %v646
      %648 = vdwg.mxu0
      %v649 = vld [vmem:[%s6] sm:$0x1]
      %v651 = vperm.slane %v649, 0
      %v653 = vadd.f32 %v602, %v651
      %v654 = vadd.f32 %v605, %v651
      %v655 = vadd.f32 %v608, %v651
      %v656 = vadd.f32 %v611, %v651
      %v657 = vadd.f32 %v614, %v651
      %v658 = vadd.f32 %v617, %v651
      %v659 = vadd.f32 %v620, %v651
      %v660 = vadd.f32 %v623, %v651
      %v661 = vadd.f32 %v626, %v651
      %v662 = vadd.f32 %v629, %v651
      %v663 = vadd.f32 %v632, %v651
      %v664 = vadd.f32 %v635, %v651
      %v665 = vadd.f32 %v638, %v651
      %v666 = vadd.f32 %v641, %v651
      %v667 = vadd.f32 %v644, %v651
      %v668 = vadd.f32 %v647, %v651
      %v669 = vmax.f32 %v653, 0.0
      %v670 = vmax.f32 %v654, 0.0
      %v671 = vmax.f32 %v655, 0.0
      %v672 = vmax.f32 %v656, 0.0
      %v673 = vmax.f32 %v657, 0.0
      %v674 = vmax.f32 %v658, 0.0
      %v675 = vmax.f32 %v659, 0.0
      %v676 = vmax.f32 %v660, 0.0
      %v677 = vmax.f32 %v661, 0.0
      %v678 = vmax.f32 %v662, 0.0
      %v679 = vmax.f32 %v663, 0.0
      %v680 = vmax.f32 %v664, 0.0
      %v681 = vmax.f32 %v665, 0.0
      %v682 = vmax.f32 %v666, 0.0
      %v683 = vmax.f32 %v667, 0.0
      %v684 = vmax.f32 %v668, 0.0
      %685 = vxpose.xlu0.b32.start [1/16] %v390, 128
      %686 = vxpose.xlu0.b32.cont [2/16] %v391, 128
      %687 = vxpose.xlu0.b32.cont [3/16] %v392, 128
      %688 = vxpose.xlu0.b32.cont [4/16] %v393, 128
      %689 = vxpose.xlu0.b32.cont [5/16] %v394, 128
      %690 = vxpose.xlu0.b32.cont [6/16] %v395, 128
      %691 = vxpose.xlu0.b32.cont [7/16] %v396, 128
      %692 = vxpose.xlu0.b32.cont [8/16] %v397, 128
      %693 = vxpose.xlu0.b32.cont [9/16] %v398, 128
      %694 = vxpose.xlu0.b32.cont [10/16] %v399, 128
      %695 = vxpose.xlu0.b32.cont [11/16] %v400, 128
      %696 = vxpose.xlu0.b32.cont [12/16] %v401, 128
      %697 = vxpose.xlu0.b32.cont [13/16] %v402, 128
      %698 = vxpose.xlu0.b32.cont [14/16] %v403, 128
      %699 = vxpose.xlu0.b32.cont [15/16] %v404, 128
      %700 = vxpose.xlu0.b32.end [16/16] %v405, 128
      %v701 = vpop.trf.xlu0
      %v702 = vpop.trf.xlu0
      %v703 = vpop.trf.xlu0
      %v704 = vpop.trf.xlu0
      %v705 = vpop.trf.xlu0
      %v706 = vpop.trf.xlu0
      %v707 = vpop.trf.xlu0
      %v708 = vpop.trf.xlu0
      %v709 = vpop.trf.xlu0
      %v710 = vpop.trf.xlu0
      %v711 = vpop.trf.xlu0
      %v712 = vpop.trf.xlu0
      %v713 = vpop.trf.xlu0
      %v714 = vpop.trf.xlu0
      %v715 = vpop.trf.xlu0
      %v716 = vpop.trf.xlu0
      %717 = vmatpush.msra.mxu0 %v684
      %718 = vmatpush.msra.mxu0 %v683
      %719 = vmatpush.msra.mxu0 %v682
      %720 = vmatpush.msra.mxu0 %v681
      %721 = vmatpush.msra.mxu0 %v680
      %722 = vmatpush.msra.mxu0 %v679
      %723 = vmatpush.msra.mxu0 %v678
      %724 = vmatpush.msra.mxu0 %v677
      %725 = vmatpush.msra.mxu0 %v676
      %726 = vmatpush.msra.mxu0 %v675
      %727 = vmatpush.msra.mxu0 %v674
      %728 = vmatpush.msra.mxu0 %v673
      %729 = vmatpush.msra.mxu0 %v672
      %730 = vmatpush.msra.mxu0 %v671
      %731 = vmatpush.msra.mxu0 %v670
      %732 = vmatpush.msra.mxu0 %v669
      %733 = vmatmul.f32.gmra.mxu0 %v701
      %v734 = vpop.f32.mrf.mxu0
      %v735 = vadd.f32 0.0, %v734
      %736 = vmatmul.f32.gmra.mxu0 %v702
      %v737 = vpop.f32.mrf.mxu0
      %v738 = vadd.f32 0.0, %v737
      %739 = vmatmul.f32.gmra.mxu0 %v703
      %v740 = vpop.f32.mrf.mxu0
      %v741 = vadd.f32 0.0, %v740
      %742 = vmatmul.f32.gmra.mxu0 %v704
      %v743 = vpop.f32.mrf.mxu0
      %v744 = vadd.f32 0.0, %v743
      %745 = vmatmul.f32.gmra.mxu0 %v705
      %v746 = vpop.f32.mrf.mxu0
      %v747 = vadd.f32 0.0, %v746
      %748 = vmatmul.f32.gmra.mxu0 %v706
      %v749 = vpop.f32.mrf.mxu0
      %v750 = vadd.f32 0.0, %v749
      %751 = vmatmul.f32.gmra.mxu0 %v707
      %v752 = vpop.f32.mrf.mxu0
      %v753 = vadd.f32 0.0, %v752
      %754 = vmatmul.f32.gmra.mxu0 %v708
      %v755 = vpop.f32.mrf.mxu0
      %v756 = vadd.f32 0.0, %v755
      %757 = vmatmul.f32.gmra.mxu0 %v709
      %v758 = vpop.f32.mrf.mxu0
      %v759 = vadd.f32 0.0, %v758
      %760 = vmatmul.f32.gmra.mxu0 %v710
      %v761 = vpop.f32.mrf.mxu0
      %v762 = vadd.f32 0.0, %v761
      %763 = vmatmul.f32.gmra.mxu0 %v711
      %v764 = vpop.f32.mrf.mxu0
      %v765 = vadd.f32 0.0, %v764
      %766 = vmatmul.f32.gmra.mxu0 %v712
      %v767 = vpop.f32.mrf.mxu0
      %v768 = vadd.f32 0.0, %v767
      %769 = vmatmul.f32.gmra.mxu0 %v713
      %v770 = vpop.f32.mrf.mxu0
      %v771 = vadd.f32 0.0, %v770
      %772 = vmatmul.f32.gmra.mxu0 %v714
      %v773 = vpop.f32.mrf.mxu0
      %v774 = vadd.f32 0.0, %v773
      %775 = vmatmul.f32.gmra.mxu0 %v715
      %v776 = vpop.f32.mrf.mxu0
      %v777 = vadd.f32 0.0, %v776
      %778 = vmatmul.f32.gmra.mxu0 %v716
      %v779 = vpop.f32.mrf.mxu0
      %v780 = vadd.f32 0.0, %v779
      %781 = vdwg.mxu0
      %v782 = vld [vmem:[#allocation8] sm:$0xff]
      %v783 = vld [vmem:[#allocation8 + $0x8] sm:$0xff]
      %v784 = vld [vmem:[#allocation8 + $0x10] sm:$0xff]
      %v785 = vld [vmem:[#allocation8 + $0x18] sm:$0xff]
      %v786 = vld [vmem:[#allocation8 + $0x20] sm:$0xff]
      %v787 = vld [vmem:[#allocation8 + $0x28] sm:$0xff]
      %v788 = vld [vmem:[#allocation8 + $0x30] sm:$0xff]
      %v789 = vld [vmem:[#allocation8 + $0x38] sm:$0xff]
      %v790 = vld [vmem:[#allocation8 + $0x40] sm:$0xff]
      %v791 = vld [vmem:[#allocation8 + $0x48] sm:$0xff]
      %v792 = vld [vmem:[#allocation8 + $0x50] sm:$0xff]
      %v793 = vld [vmem:[#allocation8 + $0x58] sm:$0xff]
      %v794 = vld [vmem:[#allocation8 + $0x60] sm:$0xff]
      %v795 = vld [vmem:[#allocation8 + $0x68] sm:$0xff]
      %v796 = vld [vmem:[#allocation8 + $0x70] sm:$0xff]
      %v797 = vld [vmem:[#allocation8 + $0x78] sm:$0xff]
      %v798 = vld [vmem:[#allocation9] sm:$0xff]
      %v799 = vld [vmem:[#allocation9 + $0x8] sm:$0xff]
      %v800 = vld [vmem:[#allocation9 + $0x10] sm:$0xff]
      %v801 = vld [vmem:[#allocation9 + $0x18] sm:$0xff]
      %v802 = vld [vmem:[#allocation9 + $0x20] sm:$0xff]
      %v803 = vld [vmem:[#allocation9 + $0x28] sm:$0xff]
      %v804 = vld [vmem:[#allocation9 + $0x30] sm:$0xff]
      %v805 = vld [vmem:[#allocation9 + $0x38] sm:$0xff]
      %v806 = vld [vmem:[#allocation9 + $0x40] sm:$0xff]
      %v807 = vld [vmem:[#allocation9 + $0x48] sm:$0xff]
      %v808 = vld [vmem:[#allocation9 + $0x50] sm:$0xff]
      %v809 = vld [vmem:[#allocation9 + $0x58] sm:$0xff]
      %v810 = vld [vmem:[#allocation9 + $0x60] sm:$0xff]
      %v811 = vld [vmem:[#allocation9 + $0x68] sm:$0xff]
      %v812 = vld [vmem:[#allocation9 + $0x70] sm:$0xff]
      %v813 = vld [vmem:[#allocation9 + $0x78] sm:$0xff]
      %814 = vmatpush.msra.mxu0 %v813
      %815 = vmatpush.msra.mxu0 %v812
      %816 = vmatpush.msra.mxu0 %v811
      %817 = vmatpush.msra.mxu0 %v810
      %818 = vmatpush.msra.mxu0 %v809
      %819 = vmatpush.msra.mxu0 %v808
      %820 = vmatpush.msra.mxu0 %v807
      %821 = vmatpush.msra.mxu0 %v806
      %822 = vmatpush.msra.mxu0 %v805
      %823 = vmatpush.msra.mxu0 %v804
      %824 = vmatpush.msra.mxu0 %v803
      %825 = vmatpush.msra.mxu0 %v802
      %826 = vmatpush.msra.mxu0 %v801
      %827 = vmatpush.msra.mxu0 %v800
      %828 = vmatpush.msra.mxu0 %v799
      %829 = vmatpush.msra.mxu0 %v798
      %830 = vmatmul.f32.gmra.mxu0 %v735
      %v831 = vpop.f32.mrf.mxu0
      %v832 = vadd.f32 0.0, %v831
      %833 = vmatmul.f32.gmra.mxu0 %v738
      %v834 = vpop.f32.mrf.mxu0
      %v835 = vadd.f32 0.0, %v834
      %836 = vmatmul.f32.gmra.mxu0 %v741
      %v837 = vpop.f32.mrf.mxu0
      %v838 = vadd.f32 0.0, %v837
      %839 = vmatmul.f32.gmra.mxu0 %v744
      %v840 = vpop.f32.mrf.mxu0
      %v841 = vadd.f32 0.0, %v840
      %842 = vmatmul.f32.gmra.mxu0 %v747
      %v843 = vpop.f32.mrf.mxu0
      %v844 = vadd.f32 0.0, %v843
      %845 = vmatmul.f32.gmra.mxu0 %v750
      %v846 = vpop.f32.mrf.mxu0
      %v847 = vadd.f32 0.0, %v846
      %848 = vmatmul.f32.gmra.mxu0 %v753
      %v849 = vpop.f32.mrf.mxu0
      %v850 = vadd.f32 0.0, %v849
      %851 = vmatmul.f32.gmra.mxu0 %v756
      %v852 = vpop.f32.mrf.mxu0
      %v853 = vadd.f32 0.0, %v852
      %854 = vmatmul.f32.gmra.mxu0 %v759
      %v855 = vpop.f32.mrf.mxu0
      %v856 = vadd.f32 0.0, %v855
      %857 = vmatmul.f32.gmra.mxu0 %v762
      %v858 = vpop.f32.mrf.mxu0
      %v859 = vadd.f32 0.0, %v858
      %860 = vmatmul.f32.gmra.mxu0 %v765
      %v861 = vpop.f32.mrf.mxu0
      %v862 = vadd.f32 0.0, %v861
      %863 = vmatmul.f32.gmra.mxu0 %v768
      %v864 = vpop.f32.mrf.mxu0
      %v865 = vadd.f32 0.0, %v864
      %866 = vmatmul.f32.gmra.mxu0 %v771
      %v867 = vpop.f32.mrf.mxu0
      %v868 = vadd.f32 0.0, %v867
      %869 = vmatmul.f32.gmra.mxu0 %v774
      %v870 = vpop.f32.mrf.mxu0
      %v871 = vadd.f32 0.0, %v870
      %872 = vmatmul.f32.gmra.mxu0 %v777
      %v873 = vpop.f32.mrf.mxu0
      %v874 = vadd.f32 0.0, %v873
      %875 = vmatmul.f32.gmra.mxu0 %v780
      %v876 = vpop.f32.mrf.mxu0
      %v877 = vadd.f32 0.0, %v876
      %878 = vdwg.mxu0
      %879 = vmatpush.msra.mxu0 %v797
      %880 = vmatpush.msra.mxu0 %v796
      %881 = vmatpush.msra.mxu0 %v795
      %882 = vmatpush.msra.mxu0 %v794
      %883 = vmatpush.msra.mxu0 %v793
      %884 = vmatpush.msra.mxu0 %v792
      %885 = vmatpush.msra.mxu0 %v791
      %886 = vmatpush.msra.mxu0 %v790
      %887 = vmatpush.msra.mxu0 %v789
      %888 = vmatpush.msra.mxu0 %v788
      %889 = vmatpush.msra.mxu0 %v787
      %890 = vmatpush.msra.mxu0 %v786
      %891 = vmatpush.msra.mxu0 %v785
      %892 = vmatpush.msra.mxu0 %v784
      %893 = vmatpush.msra.mxu0 %v783
      %894 = vmatpush.msra.mxu0 %v782
      %895 = vmatmul.f32.gmra.mxu0 %v164
      %v896 = vpop.f32.mrf.mxu0
      %v897 = vadd.f32 %v832, %v896
      %898 = vmatmul.f32.gmra.mxu0 %v165
      %v899 = vpop.f32.mrf.mxu0
      %v900 = vadd.f32 %v835, %v899
      %901 = vmatmul.f32.gmra.mxu0 %v166
      %v902 = vpop.f32.mrf.mxu0
      %v903 = vadd.f32 %v838, %v902
      %904 = vmatmul.f32.gmra.mxu0 %v167
      %v905 = vpop.f32.mrf.mxu0
      %v906 = vadd.f32 %v841, %v905
      %907 = vmatmul.f32.gmra.mxu0 %v168
      %v908 = vpop.f32.mrf.mxu0
      %v909 = vadd.f32 %v844, %v908
      %910 = vmatmul.f32.gmra.mxu0 %v169
      %v911 = vpop.f32.mrf.mxu0
      %v912 = vadd.f32 %v847, %v911
      %913 = vmatmul.f32.gmra.mxu0 %v170
      %v914 = vpop.f32.mrf.mxu0
      %v915 = vadd.f32 %v850, %v914
      %916 = vmatmul.f32.gmra.mxu0 %v171
      %v917 = vpop.f32.mrf.mxu0
      %v918 = vadd.f32 %v853, %v917
      %919 = vmatmul.f32.gmra.mxu0 %v172
      %v920 = vpop.f32.mrf.mxu0
      %v921 = vadd.f32 %v856, %v920
      %922 = vmatmul.f32.gmra.mxu0 %v173
      %v923 = vpop.f32.mrf.mxu0
      %v924 = vadd.f32 %v859, %v923
      %925 = vmatmul.f32.gmra.mxu0 %v174
      %v926 = vpop.f32.mrf.mxu0
      %v927 = vadd.f32 %v862, %v926
      %928 = vmatmul.f32.gmra.mxu0 %v175
      %v929 = vpop.f32.mrf.mxu0
      %v930 = vadd.f32 %v865, %v929
      %931 = vmatmul.f32.gmra.mxu0 %v176
      %v932 = vpop.f32.mrf.mxu0
      %v933 = vadd.f32 %v868, %v932
      %934 = vmatmul.f32.gmra.mxu0 %v177
      %v935 = vpop.f32.mrf.mxu0
      %v936 = vadd.f32 %v871, %v935
      %937 = vmatmul.f32.gmra.mxu0 %v178
      %v938 = vpop.f32.mrf.mxu0
      %v939 = vadd.f32 %v874, %v938
      %940 = vmatmul.f32.gmra.mxu0 %v179
      %v941 = vpop.f32.mrf.mxu0
      %v942 = vadd.f32 %v877, %v941
      %943 = vdwg.mxu0
      %v944 = vld [vmem:[%s9] sm:$0x1]
      %v946 = vperm.slane %v944, 0
      %v948 = vadd.f32 %v897, %v946
      %v949 = vadd.f32 %v900, %v946
      %v950 = vadd.f32 %v903, %v946
      %v951 = vadd.f32 %v906, %v946
      %v952 = vadd.f32 %v909, %v946
      %v953 = vadd.f32 %v912, %v946
      %v954 = vadd.f32 %v915, %v946
      %v955 = vadd.f32 %v918, %v946
      %v956 = vadd.f32 %v921, %v946
      %v957 = vadd.f32 %v924, %v946
      %v958 = vadd.f32 %v927, %v946
      %v959 = vadd.f32 %v930, %v946
      %v960 = vadd.f32 %v933, %v946
      %v961 = vadd.f32 %v936, %v946
      %v962 = vadd.f32 %v939, %v946
      %v963 = vadd.f32 %v942, %v946
      %v964 = vmax.f32 %v948, 0.0
      %v965 = vmax.f32 %v949, 0.0
      %v966 = vmax.f32 %v950, 0.0
      %v967 = vmax.f32 %v951, 0.0
      %v968 = vmax.f32 %v952, 0.0
      %v969 = vmax.f32 %v953, 0.0
      %v970 = vmax.f32 %v954, 0.0
      %v971 = vmax.f32 %v955, 0.0
      %v972 = vmax.f32 %v956, 0.0
      %v973 = vmax.f32 %v957, 0.0
      %v974 = vmax.f32 %v958, 0.0
      %v975 = vmax.f32 %v959, 0.0
      %v976 = vmax.f32 %v960, 0.0
      %v977 = vmax.f32 %v961, 0.0
      %v978 = vmax.f32 %v962, 0.0
      %v979 = vmax.f32 %v963, 0.0
      %980 = vst [vmem:[#allocation2] sm:$0xff] %v964
      %981 = vst [vmem:[#allocation2 + $0x8] sm:$0xff] %v965
      %982 = vst [vmem:[#allocation2 + $0x10] sm:$0xff] %v966
      %983 = vst [vmem:[#allocation2 + $0x18] sm:$0xff] %v967
      %984 = vst [vmem:[#allocation2 + $0x20] sm:$0xff] %v968
      %985 = vst [vmem:[#allocation2 + $0x28] sm:$0xff] %v969
      %986 = vst [vmem:[#allocation2 + $0x30] sm:$0xff] %v970
      %987 = vst [vmem:[#allocation2 + $0x38] sm:$0xff] %v971
      %988 = vst [vmem:[#allocation2 + $0x40] sm:$0xff] %v972
      %989 = vst [vmem:[#allocation2 + $0x48] sm:$0xff] %v973
      %990 = vst [vmem:[#allocation2 + $0x50] sm:$0xff] %v974
      %991 = vst [vmem:[#allocation2 + $0x58] sm:$0xff] %v975
      %992 = vst [vmem:[#allocation2 + $0x60] sm:$0xff] %v976
      %993 = vst [vmem:[#allocation2 + $0x68] sm:$0xff] %v977
      %994 = vst [vmem:[#allocation2 + $0x70] sm:$0xff] %v978
      %995 = vst [vmem:[#allocation2 + $0x78] sm:$0xff] %v979
    $region93: #{tpu_custom_call.1} parent=1 // pred_fallthru
      _
    %s996 = smul.u32 0, 128
    %s997 = scalar_lea.vmem %s2, %s996
    %v998 = vld [vmem:[%s997] sm:$0xff]
    %v999 = vld [vmem:[%s997 + $0x8] sm:$0xff]
    %v1000 = vld [vmem:[%s997 + $0x10] sm:$0xff]
    %v1001 = vld [vmem:[%s997 + $0x18] sm:$0xff]
    %v1002 = vld [vmem:[%s997 + $0x20] sm:$0xff]
    %v1003 = vld [vmem:[%s997 + $0x28] sm:$0xff]
    %v1004 = vld [vmem:[%s997 + $0x30] sm:$0xff]
    %v1005 = vld [vmem:[%s997 + $0x38] sm:$0xff]
    %v1006 = vld [vmem:[%s997 + $0x40] sm:$0xff]
    %v1007 = vld [vmem:[%s997 + $0x48] sm:$0xff]
    %v1008 = vld [vmem:[%s997 + $0x50] sm:$0xff]
    %v1009 = vld [vmem:[%s997 + $0x58] sm:$0xff]
    %v1010 = vld [vmem:[%s997 + $0x60] sm:$0xff]
    %v1011 = vld [vmem:[%s997 + $0x68] sm:$0xff]
    %v1012 = vld [vmem:[%s997 + $0x70] sm:$0xff]
    %v1013 = vld [vmem:[%s997 + $0x78] sm:$0xff]
    %s1014 = scalar_lea.vmem %s3, %s996
    %v1015 = vld [vmem:[%s1014] sm:$0xff]
    %v1016 = vld [vmem:[%s1014 + $0x8] sm:$0xff]
    %v1017 = vld [vmem:[%s1014 + $0x10] sm:$0xff]
    %v1018 = vld [vmem:[%s1014 + $0x18] sm:$0xff]
    %v1019 = vld [vmem:[%s1014 + $0x20] sm:$0xff]
    %v1020 = vld [vmem:[%s1014 + $0x28] sm:$0xff]
    %v1021 = vld [vmem:[%s1014 + $0x30] sm:$0xff]
    %v1022 = vld [vmem:[%s1014 + $0x38] sm:$0xff]
    %v1023 = vld [vmem:[%s1014 + $0x40] sm:$0xff]
    %v1024 = vld [vmem:[%s1014 + $0x48] sm:$0xff]
    %v1025 = vld [vmem:[%s1014 + $0x50] sm:$0xff]
    %v1026 = vld [vmem:[%s1014 + $0x58] sm:$0xff]
    %v1027 = vld [vmem:[%s1014 + $0x60] sm:$0xff]
    %v1028 = vld [vmem:[%s1014 + $0x68] sm:$0xff]
    %v1029 = vld [vmem:[%s1014 + $0x70] sm:$0xff]
    %v1030 = vld [vmem:[%s1014 + $0x78] sm:$0xff]
    %v1031 = vlaneseq
    %v1032 = vand.u32 %v1031, 127
    %1033 = vset.pattern.permute.xlu0 0
    %1034 = vperm.xlu0 %1033, %v998
    %v1035 = vpop.permute.xlu0 %1034
    %1036 = vset.pattern.permute.xlu0 0
    %1037 = vperm.xlu0 %1036, %v999
    %v1038 = vpop.permute.xlu0 %1037
    %1039 = vset.pattern.permute.xlu0 0
    %1040 = vperm.xlu0 %1039, %v1000
    %v1041 = vpop.permute.xlu0 %1040
    %1042 = vset.pattern.permute.xlu0 0
    %1043 = vperm.xlu0 %1042, %v1001
    %v1044 = vpop.permute.xlu0 %1043
    %1045 = vset.pattern.permute.xlu0 0
    %1046 = vperm.xlu0 %1045, %v1002
    %v1047 = vpop.permute.xlu0 %1046
    %1048 = vset.pattern.permute.xlu0 0
    %1049 = vperm.xlu0 %1048, %v1003
    %v1050 = vpop.permute.xlu0 %1049
    %1051 = vset.pattern.permute.xlu0 0
    %1052 = vperm.xlu0 %1051, %v1004
    %v1053 = vpop.permute.xlu0 %1052
    %1054 = vset.pattern.permute.xlu0 0
    %1055 = vperm.xlu0 %1054, %v1005
    %v1056 = vpop.permute.xlu0 %1055
    %1057 = vset.pattern.permute.xlu0 0
    %1058 = vperm.xlu0 %1057, %v1006
    %v1059 = vpop.permute.xlu0 %1058
    %1060 = vset.pattern.permute.xlu0 0
    %1061 = vperm.xlu0 %1060, %v1007
    %v1062 = vpop.permute.xlu0 %1061
    %1063 = vset.pattern.permute.xlu0 0
    %1064 = vperm.xlu0 %1063, %v1008
    %v1065 = vpop.permute.xlu0 %1064
    %1066 = vset.pattern.permute.xlu0 0
    %1067 = vperm.xlu0 %1066, %v1009
    %v1068 = vpop.permute.xlu0 %1067
    %1069 = vset.pattern.permute.xlu0 0
    %1070 = vperm.xlu0 %1069, %v1010
    %v1071 = vpop.permute.xlu0 %1070
    %1072 = vset.pattern.permute.xlu0 0
    %1073 = vperm.xlu0 %1072, %v1011
    %v1074 = vpop.permute.xlu0 %1073
    %1075 = vset.pattern.permute.xlu0 0
    %1076 = vperm.xlu0 %1075, %v1012
    %v1077 = vpop.permute.xlu0 %1076
    %1078 = vset.pattern.permute.xlu0 0
    %1079 = vperm.xlu0 %1078, %v1013
    %v1080 = vpop.permute.xlu0 %1079
    %vm1081 = vcmp.eq.s32.totalorder %v1032, %v1035
    %vm1082 = vcmp.eq.s32.totalorder %v1032, %v1038
    %vm1083 = vcmp.eq.s32.totalorder %v1032, %v1041
    %vm1084 = vcmp.eq.s32.totalorder %v1032, %v1044
    %vm1085 = vcmp.eq.s32.totalorder %v1032, %v1047
    %vm1086 = vcmp.eq.s32.totalorder %v1032, %v1050
    %vm1087 = vcmp.eq.s32.totalorder %v1032, %v1053
    %vm1088 = vcmp.eq.s32.totalorder %v1032, %v1056
    %vm1089 = vcmp.eq.s32.totalorder %v1032, %v1059
    %vm1090 = vcmp.eq.s32.totalorder %v1032, %v1062
    %vm1091 = vcmp.eq.s32.totalorder %v1032, %v1065
    %vm1092 = vcmp.eq.s32.totalorder %v1032, %v1068
    %vm1093 = vcmp.eq.s32.totalorder %v1032, %v1071
    %vm1094 = vcmp.eq.s32.totalorder %v1032, %v1074
    %vm1095 = vcmp.eq.s32.totalorder %v1032, %v1077
    %vm1096 = vcmp.eq.s32.totalorder %v1032, %v1080
    %v1097 = vsel %vm1081, 1, 0
    %v1098 = vsel %vm1082, 1, 0
    %v1099 = vsel %vm1083, 1, 0
    %v1100 = vsel %vm1084, 1, 0
    %v1101 = vsel %vm1085, 1, 0
    %v1102 = vsel %vm1086, 1, 0
    %v1103 = vsel %vm1087, 1, 0
    %v1104 = vsel %vm1088, 1, 0
    %v1105 = vsel %vm1089, 1, 0
    %v1106 = vsel %vm1090, 1, 0
    %v1107 = vsel %vm1091, 1, 0
    %v1108 = vsel %vm1092, 1, 0
    %v1109 = vsel %vm1093, 1, 0
    %v1110 = vsel %vm1094, 1, 0
    %v1111 = vsel %vm1095, 1, 0
    %v1112 = vsel %vm1096, 1, 0
    %v1113 = vcvt.s32.f32 %v1097
    %v1114 = vcvt.s32.f32 %v1098
    %v1115 = vcvt.s32.f32 %v1099
    %v1116 = vcvt.s32.f32 %v1100
    %v1117 = vcvt.s32.f32 %v1101
    %v1118 = vcvt.s32.f32 %v1102
    %v1119 = vcvt.s32.f32 %v1103
    %v1120 = vcvt.s32.f32 %v1104
    %v1121 = vcvt.s32.f32 %v1105
    %v1122 = vcvt.s32.f32 %v1106
    %v1123 = vcvt.s32.f32 %v1107
    %v1124 = vcvt.s32.f32 %v1108
    %v1125 = vcvt.s32.f32 %v1109
    %v1126 = vcvt.s32.f32 %v1110
    %v1127 = vcvt.s32.f32 %v1111
    %v1128 = vcvt.s32.f32 %v1112
    %1129 = vset.pattern.permute.xlu0 0
    %1130 = vperm.xlu0 %1129, %v1015
    %v1131 = vpop.permute.xlu0 %1130
    %1132 = vset.pattern.permute.xlu0 0
    %1133 = vperm.xlu0 %1132, %v1016
    %v1134 = vpop.permute.xlu0 %1133
    %1135 = vset.pattern.permute.xlu0 0
    %1136 = vperm.xlu0 %1135, %v1017
    %v1137 = vpop.permute.xlu0 %1136
    %1138 = vset.pattern.permute.xlu0 0
    %1139 = vperm.xlu0 %1138, %v1018
    %v1140 = vpop.permute.xlu0 %1139
    %1141 = vset.pattern.permute.xlu0 0
    %1142 = vperm.xlu0 %1141, %v1019
    %v1143 = vpop.permute.xlu0 %1142
    %1144 = vset.pattern.permute.xlu0 0
    %1145 = vperm.xlu0 %1144, %v1020
    %v1146 = vpop.permute.xlu0 %1145
    %1147 = vset.pattern.permute.xlu0 0
    %1148 = vperm.xlu0 %1147, %v1021
    %v1149 = vpop.permute.xlu0 %1148
    %1150 = vset.pattern.permute.xlu0 0
    %1151 = vperm.xlu0 %1150, %v1022
    %v1152 = vpop.permute.xlu0 %1151
    %1153 = vset.pattern.permute.xlu0 0
    %1154 = vperm.xlu0 %1153, %v1023
    %v1155 = vpop.permute.xlu0 %1154
    %1156 = vset.pattern.permute.xlu0 0
    %1157 = vperm.xlu0 %1156, %v1024
    %v1158 = vpop.permute.xlu0 %1157
    %1159 = vset.pattern.permute.xlu0 0
    %1160 = vperm.xlu0 %1159, %v1025
    %v1161 = vpop.permute.xlu0 %1160
    %1162 = vset.pattern.permute.xlu0 0
    %1163 = vperm.xlu0 %1162, %v1026
    %v1164 = vpop.permute.xlu0 %1163
    %1165 = vset.pattern.permute.xlu0 0
    %1166 = vperm.xlu0 %1165, %v1027
    %v1167 = vpop.permute.xlu0 %1166
    %1168 = vset.pattern.permute.xlu0 0
    %1169 = vperm.xlu0 %1168, %v1028
    %v1170 = vpop.permute.xlu0 %1169
    %1171 = vset.pattern.permute.xlu0 0
    %1172 = vperm.xlu0 %1171, %v1029
    %v1173 = vpop.permute.xlu0 %1172
    %1174 = vset.pattern.permute.xlu0 0
    %1175 = vperm.xlu0 %1174, %v1030
    %v1176 = vpop.permute.xlu0 %1175
    %vm1177 = vcmp.eq.s32.totalorder %v1032, %v1131
    %vm1178 = vcmp.eq.s32.totalorder %v1032, %v1134
    %vm1179 = vcmp.eq.s32.totalorder %v1032, %v1137
    %vm1180 = vcmp.eq.s32.totalorder %v1032, %v1140
    %vm1181 = vcmp.eq.s32.totalorder %v1032, %v1143
    %vm1182 = vcmp.eq.s32.totalorder %v1032, %v1146
    %vm1183 = vcmp.eq.s32.totalorder %v1032, %v1149
    %vm1184 = vcmp.eq.s32.totalorder %v1032, %v1152
    %vm1185 = vcmp.eq.s32.totalorder %v1032, %v1155
    %vm1186 = vcmp.eq.s32.totalorder %v1032, %v1158
    %vm1187 = vcmp.eq.s32.totalorder %v1032, %v1161
    %vm1188 = vcmp.eq.s32.totalorder %v1032, %v1164
    %vm1189 = vcmp.eq.s32.totalorder %v1032, %v1167
    %vm1190 = vcmp.eq.s32.totalorder %v1032, %v1170
    %vm1191 = vcmp.eq.s32.totalorder %v1032, %v1173
    %vm1192 = vcmp.eq.s32.totalorder %v1032, %v1176
    %v1193 = vsel %vm1177, 1, 0
    %v1194 = vsel %vm1178, 1, 0
    %v1195 = vsel %vm1179, 1, 0
    %v1196 = vsel %vm1180, 1, 0
    %v1197 = vsel %vm1181, 1, 0
    %v1198 = vsel %vm1182, 1, 0
    %v1199 = vsel %vm1183, 1, 0
    %v1200 = vsel %vm1184, 1, 0
    %v1201 = vsel %vm1185, 1, 0
    %v1202 = vsel %vm1186, 1, 0
    %v1203 = vsel %vm1187, 1, 0
    %v1204 = vsel %vm1188, 1, 0
    %v1205 = vsel %vm1189, 1, 0
    %v1206 = vsel %vm1190, 1, 0
    %v1207 = vsel %vm1191, 1, 0
    %v1208 = vsel %vm1192, 1, 0
    %v1209 = vcvt.s32.f32 %v1193
    %v1210 = vcvt.s32.f32 %v1194
    %v1211 = vcvt.s32.f32 %v1195
    %v1212 = vcvt.s32.f32 %v1196
    %v1213 = vcvt.s32.f32 %v1197
    %v1214 = vcvt.s32.f32 %v1198
    %v1215 = vcvt.s32.f32 %v1199
    %v1216 = vcvt.s32.f32 %v1200
    %v1217 = vcvt.s32.f32 %v1201
    %v1218 = vcvt.s32.f32 %v1202
    %v1219 = vcvt.s32.f32 %v1203
    %v1220 = vcvt.s32.f32 %v1204
    %v1221 = vcvt.s32.f32 %v1205
    %v1222 = vcvt.s32.f32 %v1206
    %v1223 = vcvt.s32.f32 %v1207
    %v1224 = vcvt.s32.f32 %v1208
    %v1225 = vld [vmem:[#allocation2] sm:$0xff]
    %v1226 = vld [vmem:[#allocation2 + $0x8] sm:$0xff]
    %v1227 = vld [vmem:[#allocation2 + $0x10] sm:$0xff]
    %v1228 = vld [vmem:[#allocation2 + $0x18] sm:$0xff]
    %v1229 = vld [vmem:[#allocation2 + $0x20] sm:$0xff]
    %v1230 = vld [vmem:[#allocation2 + $0x28] sm:$0xff]
    %v1231 = vld [vmem:[#allocation2 + $0x30] sm:$0xff]
    %v1232 = vld [vmem:[#allocation2 + $0x38] sm:$0xff]
    %v1233 = vld [vmem:[#allocation2 + $0x40] sm:$0xff]
    %v1234 = vld [vmem:[#allocation2 + $0x48] sm:$0xff]
    %v1235 = vld [vmem:[#allocation2 + $0x50] sm:$0xff]
    %v1236 = vld [vmem:[#allocation2 + $0x58] sm:$0xff]
    %v1237 = vld [vmem:[#allocation2 + $0x60] sm:$0xff]
    %v1238 = vld [vmem:[#allocation2 + $0x68] sm:$0xff]
    %v1239 = vld [vmem:[#allocation2 + $0x70] sm:$0xff]
    %v1240 = vld [vmem:[#allocation2 + $0x78] sm:$0xff]
    %1241 = vmatpush.msra.mxu0 %v1240
    %1242 = vmatpush.msra.mxu0 %v1239
    %1243 = vmatpush.msra.mxu0 %v1238
    %1244 = vmatpush.msra.mxu0 %v1237
    %1245 = vmatpush.msra.mxu0 %v1236
    %1246 = vmatpush.msra.mxu0 %v1235
    %1247 = vmatpush.msra.mxu0 %v1234
    %1248 = vmatpush.msra.mxu0 %v1233
    %1249 = vmatpush.msra.mxu0 %v1232
    %1250 = vmatpush.msra.mxu0 %v1231
    %1251 = vmatpush.msra.mxu0 %v1230
    %1252 = vmatpush.msra.mxu0 %v1229
    %1253 = vmatpush.msra.mxu0 %v1228
    %1254 = vmatpush.msra.mxu0 %v1227
    %1255 = vmatpush.msra.mxu0 %v1226
    %1256 = vmatpush.msra.mxu0 %v1225
    %1257 = vmatmul.f32.gmra.mxu0 %v1113
    %v1258 = vpop.f32.mrf.mxu0
    %v1259 = vadd.f32 0.0, %v1258
    %1260 = vmatmul.f32.gmra.mxu0 %v1114
    %v1261 = vpop.f32.mrf.mxu0
    %v1262 = vadd.f32 0.0, %v1261
    %1263 = vmatmul.f32.gmra.mxu0 %v1115
    %v1264 = vpop.f32.mrf.mxu0
    %v1265 = vadd.f32 0.0, %v1264
    %1266 = vmatmul.f32.gmra.mxu0 %v1116
    %v1267 = vpop.f32.mrf.mxu0
    %v1268 = vadd.f32 0.0, %v1267
    %1269 = vmatmul.f32.gmra.mxu0 %v1117
    %v1270 = vpop.f32.mrf.mxu0
    %v1271 = vadd.f32 0.0, %v1270
    %1272 = vmatmul.f32.gmra.mxu0 %v1118
    %v1273 = vpop.f32.mrf.mxu0
    %v1274 = vadd.f32 0.0, %v1273
    %1275 = vmatmul.f32.gmra.mxu0 %v1119
    %v1276 = vpop.f32.mrf.mxu0
    %v1277 = vadd.f32 0.0, %v1276
    %1278 = vmatmul.f32.gmra.mxu0 %v1120
    %v1279 = vpop.f32.mrf.mxu0
    %v1280 = vadd.f32 0.0, %v1279
    %1281 = vmatmul.f32.gmra.mxu0 %v1121
    %v1282 = vpop.f32.mrf.mxu0
    %v1283 = vadd.f32 0.0, %v1282
    %1284 = vmatmul.f32.gmra.mxu0 %v1122
    %v1285 = vpop.f32.mrf.mxu0
    %v1286 = vadd.f32 0.0, %v1285
    %1287 = vmatmul.f32.gmra.mxu0 %v1123
    %v1288 = vpop.f32.mrf.mxu0
    %v1289 = vadd.f32 0.0, %v1288
    %1290 = vmatmul.f32.gmra.mxu0 %v1124
    %v1291 = vpop.f32.mrf.mxu0
    %v1292 = vadd.f32 0.0, %v1291
    %1293 = vmatmul.f32.gmra.mxu0 %v1125
    %v1294 = vpop.f32.mrf.mxu0
    %v1295 = vadd.f32 0.0, %v1294
    %1296 = vmatmul.f32.gmra.mxu0 %v1126
    %v1297 = vpop.f32.mrf.mxu0
    %v1298 = vadd.f32 0.0, %v1297
    %1299 = vmatmul.f32.gmra.mxu0 %v1127
    %v1300 = vpop.f32.mrf.mxu0
    %v1301 = vadd.f32 0.0, %v1300
    %1302 = vmatmul.f32.gmra.mxu0 %v1128
    %v1303 = vpop.f32.mrf.mxu0
    %v1304 = vadd.f32 0.0, %v1303
    %1305 = vmatmul.f32.gmra.mxu0 %v1209
    %v1306 = vpop.f32.mrf.mxu0
    %v1307 = vadd.f32 0.0, %v1306
    %1308 = vmatmul.f32.gmra.mxu0 %v1210
    %v1309 = vpop.f32.mrf.mxu0
    %v1310 = vadd.f32 0.0, %v1309
    %1311 = vmatmul.f32.gmra.mxu0 %v1211
    %v1312 = vpop.f32.mrf.mxu0
    %v1313 = vadd.f32 0.0, %v1312
    %1314 = vmatmul.f32.gmra.mxu0 %v1212
    %v1315 = vpop.f32.mrf.mxu0
    %v1316 = vadd.f32 0.0, %v1315
    %1317 = vmatmul.f32.gmra.mxu0 %v1213
    %v1318 = vpop.f32.mrf.mxu0
    %v1319 = vadd.f32 0.0, %v1318
    %1320 = vmatmul.f32.gmra.mxu0 %v1214
    %v1321 = vpop.f32.mrf.mxu0
    %v1322 = vadd.f32 0.0, %v1321
    %1323 = vmatmul.f32.gmra.mxu0 %v1215
    %v1324 = vpop.f32.mrf.mxu0
    %v1325 = vadd.f32 0.0, %v1324
    %1326 = vmatmul.f32.gmra.mxu0 %v1216
    %v1327 = vpop.f32.mrf.mxu0
    %v1328 = vadd.f32 0.0, %v1327
    %1329 = vmatmul.f32.gmra.mxu0 %v1217
    %v1330 = vpop.f32.mrf.mxu0
    %v1331 = vadd.f32 0.0, %v1330
    %1332 = vmatmul.f32.gmra.mxu0 %v1218
    %v1333 = vpop.f32.mrf.mxu0
    %v1334 = vadd.f32 0.0, %v1333
    %1335 = vmatmul.f32.gmra.mxu0 %v1219
    %v1336 = vpop.f32.mrf.mxu0
    %v1337 = vadd.f32 0.0, %v1336
    %1338 = vmatmul.f32.gmra.mxu0 %v1220
    %v1339 = vpop.f32.mrf.mxu0
    %v1340 = vadd.f32 0.0, %v1339
    %1341 = vmatmul.f32.gmra.mxu0 %v1221
    %v1342 = vpop.f32.mrf.mxu0
    %v1343 = vadd.f32 0.0, %v1342
    %1344 = vmatmul.f32.gmra.mxu0 %v1222
    %v1345 = vpop.f32.mrf.mxu0
    %v1346 = vadd.f32 0.0, %v1345
    %1347 = vmatmul.f32.gmra.mxu0 %v1223
    %v1348 = vpop.f32.mrf.mxu0
    %v1349 = vadd.f32 0.0, %v1348
    %1350 = vmatmul.f32.gmra.mxu0 %v1224
    %v1351 = vpop.f32.mrf.mxu0
    %v1352 = vadd.f32 0.0, %v1351
    %1353 = vdwg.mxu0
    %v1354 = vld [vmem:[#allocation11] sm:$0xff]
    %v1355 = vld [vmem:[#allocation11 + $0x8] sm:$0xff]
    %v1356 = vld [vmem:[#allocation11 + $0x10] sm:$0xff]
    %v1357 = vld [vmem:[#allocation11 + $0x18] sm:$0xff]
    %v1358 = vld [vmem:[#allocation11 + $0x20] sm:$0xff]
    %v1359 = vld [vmem:[#allocation11 + $0x28] sm:$0xff]
    %v1360 = vld [vmem:[#allocation11 + $0x30] sm:$0xff]
    %v1361 = vld [vmem:[#allocation11 + $0x38] sm:$0xff]
    %v1362 = vld [vmem:[#allocation11 + $0x40] sm:$0xff]
    %v1363 = vld [vmem:[#allocation11 + $0x48] sm:$0xff]
    %v1364 = vld [vmem:[#allocation11 + $0x50] sm:$0xff]
    %v1365 = vld [vmem:[#allocation11 + $0x58] sm:$0xff]
    %v1366 = vld [vmem:[#allocation11 + $0x60] sm:$0xff]
    %v1367 = vld [vmem:[#allocation11 + $0x68] sm:$0xff]
    %v1368 = vld [vmem:[#allocation11 + $0x70] sm:$0xff]
    %v1369 = vld [vmem:[#allocation11 + $0x78] sm:$0xff]
    %1370 = vmatpush.msra.mxu0 %v1369
    %1371 = vmatpush.msra.mxu0 %v1368
    %1372 = vmatpush.msra.mxu0 %v1367
    %1373 = vmatpush.msra.mxu0 %v1366
    %1374 = vmatpush.msra.mxu0 %v1365
    %1375 = vmatpush.msra.mxu0 %v1364
    %1376 = vmatpush.msra.mxu0 %v1363
    %1377 = vmatpush.msra.mxu0 %v1362
    %1378 = vmatpush.msra.mxu0 %v1361
    %1379 = vmatpush.msra.mxu0 %v1360
    %1380 = vmatpush.msra.mxu0 %v1359
    %1381 = vmatpush.msra.mxu0 %v1358
    %1382 = vmatpush.msra.mxu0 %v1357
    %1383 = vmatpush.msra.mxu0 %v1356
    %1384 = vmatpush.msra.mxu0 %v1355
    %1385 = vmatpush.msra.mxu0 %v1354
    %1386 = vmatmul.f32.gmra.mxu0 %v1259
    %v1387 = vpop.f32.mrf.mxu0
    %v1388 = vadd.f32 0.0, %v1387
    %1389 = vmatmul.f32.gmra.mxu0 %v1262
    %v1390 = vpop.f32.mrf.mxu0
    %v1391 = vadd.f32 0.0, %v1390
    %1392 = vmatmul.f32.gmra.mxu0 %v1265
    %v1393 = vpop.f32.mrf.mxu0
    %v1394 = vadd.f32 0.0, %v1393
    %1395 = vmatmul.f32.gmra.mxu0 %v1268
    %v1396 = vpop.f32.mrf.mxu0
    %v1397 = vadd.f32 0.0, %v1396
    %1398 = vmatmul.f32.gmra.mxu0 %v1271
    %v1399 = vpop.f32.mrf.mxu0
    %v1400 = vadd.f32 0.0, %v1399
    %1401 = vmatmul.f32.gmra.mxu0 %v1274
    %v1402 = vpop.f32.mrf.mxu0
    %v1403 = vadd.f32 0.0, %v1402
    %1404 = vmatmul.f32.gmra.mxu0 %v1277
    %v1405 = vpop.f32.mrf.mxu0
    %v1406 = vadd.f32 0.0, %v1405
    %1407 = vmatmul.f32.gmra.mxu0 %v1280
    %v1408 = vpop.f32.mrf.mxu0
    %v1409 = vadd.f32 0.0, %v1408
    %1410 = vmatmul.f32.gmra.mxu0 %v1283
    %v1411 = vpop.f32.mrf.mxu0
    %v1412 = vadd.f32 0.0, %v1411
    %1413 = vmatmul.f32.gmra.mxu0 %v1286
    %v1414 = vpop.f32.mrf.mxu0
    %v1415 = vadd.f32 0.0, %v1414
    %1416 = vmatmul.f32.gmra.mxu0 %v1289
    %v1417 = vpop.f32.mrf.mxu0
    %v1418 = vadd.f32 0.0, %v1417
    %1419 = vmatmul.f32.gmra.mxu0 %v1292
    %v1420 = vpop.f32.mrf.mxu0
    %v1421 = vadd.f32 0.0, %v1420
    %1422 = vmatmul.f32.gmra.mxu0 %v1295
    %v1423 = vpop.f32.mrf.mxu0
    %v1424 = vadd.f32 0.0, %v1423
    %1425 = vmatmul.f32.gmra.mxu0 %v1298
    %v1426 = vpop.f32.mrf.mxu0
    %v1427 = vadd.f32 0.0, %v1426
    %1428 = vmatmul.f32.gmra.mxu0 %v1301
    %v1429 = vpop.f32.mrf.mxu0
    %v1430 = vadd.f32 0.0, %v1429
    %1431 = vmatmul.f32.gmra.mxu0 %v1304
    %v1432 = vpop.f32.mrf.mxu0
    %v1433 = vadd.f32 0.0, %v1432
    %1434 = vmatmul.f32.gmra.mxu0 %v1307
    %v1435 = vpop.f32.mrf.mxu0
    %v1436 = vadd.f32 0.0, %v1435
    %1437 = vmatmul.f32.gmra.mxu0 %v1310
    %v1438 = vpop.f32.mrf.mxu0
    %v1439 = vadd.f32 0.0, %v1438
    %1440 = vmatmul.f32.gmra.mxu0 %v1313
    %v1441 = vpop.f32.mrf.mxu0
    %v1442 = vadd.f32 0.0, %v1441
    %1443 = vmatmul.f32.gmra.mxu0 %v1316
    %v1444 = vpop.f32.mrf.mxu0
    %v1445 = vadd.f32 0.0, %v1444
    %1446 = vmatmul.f32.gmra.mxu0 %v1319
    %v1447 = vpop.f32.mrf.mxu0
    %v1448 = vadd.f32 0.0, %v1447
    %1449 = vmatmul.f32.gmra.mxu0 %v1322
    %v1450 = vpop.f32.mrf.mxu0
    %v1451 = vadd.f32 0.0, %v1450
    %1452 = vmatmul.f32.gmra.mxu0 %v1325
    %v1453 = vpop.f32.mrf.mxu0
    %v1454 = vadd.f32 0.0, %v1453
    %1455 = vmatmul.f32.gmra.mxu0 %v1328
    %v1456 = vpop.f32.mrf.mxu0
    %v1457 = vadd.f32 0.0, %v1456
    %1458 = vmatmul.f32.gmra.mxu0 %v1331
    %v1459 = vpop.f32.mrf.mxu0
    %v1460 = vadd.f32 0.0, %v1459
    %1461 = vmatmul.f32.gmra.mxu0 %v1334
    %v1462 = vpop.f32.mrf.mxu0
    %v1463 = vadd.f32 0.0, %v1462
    %1464 = vmatmul.f32.gmra.mxu0 %v1337
    %v1465 = vpop.f32.mrf.mxu0
    %v1466 = vadd.f32 0.0, %v1465
    %1467 = vmatmul.f32.gmra.mxu0 %v1340
    %v1468 = vpop.f32.mrf.mxu0
    %v1469 = vadd.f32 0.0, %v1468
    %1470 = vmatmul.f32.gmra.mxu0 %v1343
    %v1471 = vpop.f32.mrf.mxu0
    %v1472 = vadd.f32 0.0, %v1471
    %1473 = vmatmul.f32.gmra.mxu0 %v1346
    %v1474 = vpop.f32.mrf.mxu0
    %v1475 = vadd.f32 0.0, %v1474
    %1476 = vmatmul.f32.gmra.mxu0 %v1349
    %v1477 = vpop.f32.mrf.mxu0
    %v1478 = vadd.f32 0.0, %v1477
    %1479 = vmatmul.f32.gmra.mxu0 %v1352
    %v1480 = vpop.f32.mrf.mxu0
    %v1481 = vadd.f32 0.0, %v1480
    %1482 = vdwg.mxu0
    %v1483 = vld [vmem:[#allocation12] sm:$0xff]
    %v1484 = vld [vmem:[#allocation12 + $0x8] sm:$0xff]
    %v1485 = vld [vmem:[#allocation12 + $0x10] sm:$0xff]
    %v1486 = vld [vmem:[#allocation12 + $0x18] sm:$0xff]
    %v1487 = vld [vmem:[#allocation12 + $0x20] sm:$0xff]
    %v1488 = vld [vmem:[#allocation12 + $0x28] sm:$0xff]
    %v1489 = vld [vmem:[#allocation12 + $0x30] sm:$0xff]
    %v1490 = vld [vmem:[#allocation12 + $0x38] sm:$0xff]
    %v1491 = vld [vmem:[#allocation12 + $0x40] sm:$0xff]
    %v1492 = vld [vmem:[#allocation12 + $0x48] sm:$0xff]
    %v1493 = vld [vmem:[#allocation12 + $0x50] sm:$0xff]
    %v1494 = vld [vmem:[#allocation12 + $0x58] sm:$0xff]
    %v1495 = vld [vmem:[#allocation12 + $0x60] sm:$0xff]
    %v1496 = vld [vmem:[#allocation12 + $0x68] sm:$0xff]
    %v1497 = vld [vmem:[#allocation12 + $0x70] sm:$0xff]
    %v1498 = vld [vmem:[#allocation12 + $0x78] sm:$0xff]
    %1499 = vmatpush.msra.mxu0 %v1498
    %1500 = vmatpush.msra.mxu0 %v1497
    %1501 = vmatpush.msra.mxu0 %v1496
    %1502 = vmatpush.msra.mxu0 %v1495
    %1503 = vmatpush.msra.mxu0 %v1494
    %1504 = vmatpush.msra.mxu0 %v1493
    %1505 = vmatpush.msra.mxu0 %v1492
    %1506 = vmatpush.msra.mxu0 %v1491
    %1507 = vmatpush.msra.mxu0 %v1490
    %1508 = vmatpush.msra.mxu0 %v1489
    %1509 = vmatpush.msra.mxu0 %v1488
    %1510 = vmatpush.msra.mxu0 %v1487
    %1511 = vmatpush.msra.mxu0 %v1486
    %1512 = vmatpush.msra.mxu0 %v1485
    %1513 = vmatpush.msra.mxu0 %v1484
    %1514 = vmatpush.msra.mxu0 %v1483
    %1515 = vmatmul.f32.gmra.mxu0 %v1259
    %v1516 = vpop.f32.mrf.mxu0
    %v1517 = vadd.f32 0.0, %v1516
    %1518 = vmatmul.f32.gmra.mxu0 %v1262
    %v1519 = vpop.f32.mrf.mxu0
    %v1520 = vadd.f32 0.0, %v1519
    %1521 = vmatmul.f32.gmra.mxu0 %v1265
    %v1522 = vpop.f32.mrf.mxu0
    %v1523 = vadd.f32 0.0, %v1522
    %1524 = vmatmul.f32.gmra.mxu0 %v1268
    %v1525 = vpop.f32.mrf.mxu0
    %v1526 = vadd.f32 0.0, %v1525
    %1527 = vmatmul.f32.gmra.mxu0 %v1271
    %v1528 = vpop.f32.mrf.mxu0
    %v1529 = vadd.f32 0.0, %v1528
    %1530 = vmatmul.f32.gmra.mxu0 %v1274
    %v1531 = vpop.f32.mrf.mxu0
    %v1532 = vadd.f32 0.0, %v1531
    %1533 = vmatmul.f32.gmra.mxu0 %v1277
    %v1534 = vpop.f32.mrf.mxu0
    %v1535 = vadd.f32 0.0, %v1534
    %1536 = vmatmul.f32.gmra.mxu0 %v1280
    %v1537 = vpop.f32.mrf.mxu0
    %v1538 = vadd.f32 0.0, %v1537
    %1539 = vmatmul.f32.gmra.mxu0 %v1283
    %v1540 = vpop.f32.mrf.mxu0
    %v1541 = vadd.f32 0.0, %v1540
    %1542 = vmatmul.f32.gmra.mxu0 %v1286
    %v1543 = vpop.f32.mrf.mxu0
    %v1544 = vadd.f32 0.0, %v1543
    %1545 = vmatmul.f32.gmra.mxu0 %v1289
    %v1546 = vpop.f32.mrf.mxu0
    %v1547 = vadd.f32 0.0, %v1546
    %1548 = vmatmul.f32.gmra.mxu0 %v1292
    %v1549 = vpop.f32.mrf.mxu0
    %v1550 = vadd.f32 0.0, %v1549
    %1551 = vmatmul.f32.gmra.mxu0 %v1295
    %v1552 = vpop.f32.mrf.mxu0
    %v1553 = vadd.f32 0.0, %v1552
    %1554 = vmatmul.f32.gmra.mxu0 %v1298
    %v1555 = vpop.f32.mrf.mxu0
    %v1556 = vadd.f32 0.0, %v1555
    %1557 = vmatmul.f32.gmra.mxu0 %v1301
    %v1558 = vpop.f32.mrf.mxu0
    %v1559 = vadd.f32 0.0, %v1558
    %1560 = vmatmul.f32.gmra.mxu0 %v1304
    %v1561 = vpop.f32.mrf.mxu0
    %v1562 = vadd.f32 0.0, %v1561
    %1563 = vmatmul.f32.gmra.mxu0 %v1307
    %v1564 = vpop.f32.mrf.mxu0
    %v1565 = vadd.f32 0.0, %v1564
    %1566 = vmatmul.f32.gmra.mxu0 %v1310
    %v1567 = vpop.f32.mrf.mxu0
    %v1568 = vadd.f32 0.0, %v1567
    %1569 = vmatmul.f32.gmra.mxu0 %v1313
    %v1570 = vpop.f32.mrf.mxu0
    %v1571 = vadd.f32 0.0, %v1570
    %1572 = vmatmul.f32.gmra.mxu0 %v1316
    %v1573 = vpop.f32.mrf.mxu0
    %v1574 = vadd.f32 0.0, %v1573
    %1575 = vmatmul.f32.gmra.mxu0 %v1319
    %v1576 = vpop.f32.mrf.mxu0
    %v1577 = vadd.f32 0.0, %v1576
    %1578 = vmatmul.f32.gmra.mxu0 %v1322
    %v1579 = vpop.f32.mrf.mxu0
    %v1580 = vadd.f32 0.0, %v1579
    %1581 = vmatmul.f32.gmra.mxu0 %v1325
    %v1582 = vpop.f32.mrf.mxu0
    %v1583 = vadd.f32 0.0, %v1582
    %1584 = vmatmul.f32.gmra.mxu0 %v1328
    %v1585 = vpop.f32.mrf.mxu0
    %v1586 = vadd.f32 0.0, %v1585
    %1587 = vmatmul.f32.gmra.mxu0 %v1331
    %v1588 = vpop.f32.mrf.mxu0
    %v1589 = vadd.f32 0.0, %v1588
    %1590 = vmatmul.f32.gmra.mxu0 %v1334
    %v1591 = vpop.f32.mrf.mxu0
    %v1592 = vadd.f32 0.0, %v1591
    %1593 = vmatmul.f32.gmra.mxu0 %v1337
    %v1594 = vpop.f32.mrf.mxu0
    %v1595 = vadd.f32 0.0, %v1594
    %1596 = vmatmul.f32.gmra.mxu0 %v1340
    %v1597 = vpop.f32.mrf.mxu0
    %v1598 = vadd.f32 0.0, %v1597
    %1599 = vmatmul.f32.gmra.mxu0 %v1343
    %v1600 = vpop.f32.mrf.mxu0
    %v1601 = vadd.f32 0.0, %v1600
    %1602 = vmatmul.f32.gmra.mxu0 %v1346
    %v1603 = vpop.f32.mrf.mxu0
    %v1604 = vadd.f32 0.0, %v1603
    %1605 = vmatmul.f32.gmra.mxu0 %v1349
    %v1606 = vpop.f32.mrf.mxu0
    %v1607 = vadd.f32 0.0, %v1606
    %1608 = vmatmul.f32.gmra.mxu0 %v1352
    %v1609 = vpop.f32.mrf.mxu0
    %v1610 = vadd.f32 0.0, %v1609
    %1611 = vdwg.mxu0
    %v1612 = vadd.f32 %v1388, %v1565
    %v1613 = vadd.f32 %v1391, %v1568
    %v1614 = vadd.f32 %v1394, %v1571
    %v1615 = vadd.f32 %v1397, %v1574
    %v1616 = vadd.f32 %v1400, %v1577
    %v1617 = vadd.f32 %v1403, %v1580
    %v1618 = vadd.f32 %v1406, %v1583
    %v1619 = vadd.f32 %v1409, %v1586
    %v1620 = vadd.f32 %v1412, %v1589
    %v1621 = vadd.f32 %v1415, %v1592
    %v1622 = vadd.f32 %v1418, %v1595
    %v1623 = vadd.f32 %v1421, %v1598
    %v1624 = vadd.f32 %v1424, %v1601
    %v1625 = vadd.f32 %v1427, %v1604
    %v1626 = vadd.f32 %v1430, %v1607
    %v1627 = vadd.f32 %v1433, %v1610
    %v1628 = vld [vmem:[%s12] sm:$0x1]
    %v1630 = vperm.slane %v1628, 0
    %v1632 = vadd.f32 %v1612, %v1630
    %v1633 = vadd.f32 %v1613, %v1630
    %v1634 = vadd.f32 %v1614, %v1630
    %v1635 = vadd.f32 %v1615, %v1630
    %v1636 = vadd.f32 %v1616, %v1630
    %v1637 = vadd.f32 %v1617, %v1630
    %v1638 = vadd.f32 %v1618, %v1630
    %v1639 = vadd.f32 %v1619, %v1630
    %v1640 = vadd.f32 %v1620, %v1630
    %v1641 = vadd.f32 %v1621, %v1630
    %v1642 = vadd.f32 %v1622, %v1630
    %v1643 = vadd.f32 %v1623, %v1630
    %v1644 = vadd.f32 %v1624, %v1630
    %v1645 = vadd.f32 %v1625, %v1630
    %v1646 = vadd.f32 %v1626, %v1630
    %v1647 = vadd.f32 %v1627, %v1630
    %v1648 = vmax.f32 %v1632, 0.0
    %v1649 = vmax.f32 %v1633, 0.0
    %v1650 = vmax.f32 %v1634, 0.0
    %v1651 = vmax.f32 %v1635, 0.0
    %v1652 = vmax.f32 %v1636, 0.0
    %v1653 = vmax.f32 %v1637, 0.0
    %v1654 = vmax.f32 %v1638, 0.0
    %v1655 = vmax.f32 %v1639, 0.0
    %v1656 = vmax.f32 %v1640, 0.0
    %v1657 = vmax.f32 %v1641, 0.0
    %v1658 = vmax.f32 %v1642, 0.0
    %v1659 = vmax.f32 %v1643, 0.0
    %v1660 = vmax.f32 %v1644, 0.0
    %v1661 = vmax.f32 %v1645, 0.0
    %v1662 = vmax.f32 %v1646, 0.0
    %v1663 = vmax.f32 %v1647, 0.0
    %v1664 = vadd.f32 %v1436, %v1517
    %v1665 = vadd.f32 %v1439, %v1520
    %v1666 = vadd.f32 %v1442, %v1523
    %v1667 = vadd.f32 %v1445, %v1526
    %v1668 = vadd.f32 %v1448, %v1529
    %v1669 = vadd.f32 %v1451, %v1532
    %v1670 = vadd.f32 %v1454, %v1535
    %v1671 = vadd.f32 %v1457, %v1538
    %v1672 = vadd.f32 %v1460, %v1541
    %v1673 = vadd.f32 %v1463, %v1544
    %v1674 = vadd.f32 %v1466, %v1547
    %v1675 = vadd.f32 %v1469, %v1550
    %v1676 = vadd.f32 %v1472, %v1553
    %v1677 = vadd.f32 %v1475, %v1556
    %v1678 = vadd.f32 %v1478, %v1559
    %v1679 = vadd.f32 %v1481, %v1562
    %v1680 = vadd.f32 %v1664, %v1630
    %v1681 = vadd.f32 %v1665, %v1630
    %v1682 = vadd.f32 %v1666, %v1630
    %v1683 = vadd.f32 %v1667, %v1630
    %v1684 = vadd.f32 %v1668, %v1630
    %v1685 = vadd.f32 %v1669, %v1630
    %v1686 = vadd.f32 %v1670, %v1630
    %v1687 = vadd.f32 %v1671, %v1630
    %v1688 = vadd.f32 %v1672, %v1630
    %v1689 = vadd.f32 %v1673, %v1630
    %v1690 = vadd.f32 %v1674, %v1630
    %v1691 = vadd.f32 %v1675, %v1630
    %v1692 = vadd.f32 %v1676, %v1630
    %v1693 = vadd.f32 %v1677, %v1630
    %v1694 = vadd.f32 %v1678, %v1630
    %v1695 = vadd.f32 %v1679, %v1630
    %v1696 = vmax.f32 %v1680, 0.0
    %v1697 = vmax.f32 %v1681, 0.0
    %v1698 = vmax.f32 %v1682, 0.0
    %v1699 = vmax.f32 %v1683, 0.0
    %v1700 = vmax.f32 %v1684, 0.0
    %v1701 = vmax.f32 %v1685, 0.0
    %v1702 = vmax.f32 %v1686, 0.0
    %v1703 = vmax.f32 %v1687, 0.0
    %v1704 = vmax.f32 %v1688, 0.0
    %v1705 = vmax.f32 %v1689, 0.0
    %v1706 = vmax.f32 %v1690, 0.0
    %v1707 = vmax.f32 %v1691, 0.0
    %v1708 = vmax.f32 %v1692, 0.0
    %v1709 = vmax.f32 %v1693, 0.0
    %v1710 = vmax.f32 %v1694, 0.0
    %v1711 = vmax.f32 %v1695, 0.0
    %v1712 = vadd.f32 %v1648, %v1696
    %v1713 = vadd.f32 %v1649, %v1697
    %v1714 = vadd.f32 %v1650, %v1698
    %v1715 = vadd.f32 %v1651, %v1699
    %v1716 = vadd.f32 %v1652, %v1700
    %v1717 = vadd.f32 %v1653, %v1701
    %v1718 = vadd.f32 %v1654, %v1702
    %v1719 = vadd.f32 %v1655, %v1703
    %v1720 = vadd.f32 %v1656, %v1704
    %v1721 = vadd.f32 %v1657, %v1705
    %v1722 = vadd.f32 %v1658, %v1706
    %v1723 = vadd.f32 %v1659, %v1707
    %v1724 = vadd.f32 %v1660, %v1708
    %v1725 = vadd.f32 %v1661, %v1709
    %v1726 = vadd.f32 %v1662, %v1710
    %v1727 = vadd.f32 %v1663, %v1711
    %v1728 = vld [vmem:[#allocation14] sm:$0xff]
    %v1729 = vld [vmem:[#allocation14 + $0x8] sm:$0xff]
    %v1730 = vld [vmem:[#allocation14 + $0x10] sm:$0xff]
    %v1731 = vld [vmem:[#allocation14 + $0x18] sm:$0xff]
    %v1732 = vld [vmem:[#allocation14 + $0x20] sm:$0xff]
    %v1733 = vld [vmem:[#allocation14 + $0x28] sm:$0xff]
    %v1734 = vld [vmem:[#allocation14 + $0x30] sm:$0xff]
    %v1735 = vld [vmem:[#allocation14 + $0x38] sm:$0xff]
    %v1736 = vld [vmem:[#allocation14 + $0x40] sm:$0xff]
    %v1737 = vld [vmem:[#allocation14 + $0x48] sm:$0xff]
    %v1738 = vld [vmem:[#allocation14 + $0x50] sm:$0xff]
    %v1739 = vld [vmem:[#allocation14 + $0x58] sm:$0xff]
    %v1740 = vld [vmem:[#allocation14 + $0x60] sm:$0xff]
    %v1741 = vld [vmem:[#allocation14 + $0x68] sm:$0xff]
    %v1742 = vld [vmem:[#allocation14 + $0x70] sm:$0xff]
    %v1743 = vld [vmem:[#allocation14 + $0x78] sm:$0xff]
    %v1744 = vld [vmem:[%s14] sm:$0x1]
    %v1745 = vmul.f32 %v1744, 2.0
    %v1747 = vperm.slane %v1745, 0
    %1749 = vmatpush.msra.mxu0 %v1743
    %1750 = vmatpush.msra.mxu0 %v1742
    %1751 = vmatpush.msra.mxu0 %v1741
    %1752 = vmatpush.msra.mxu0 %v1740
    %1753 = vmatpush.msra.mxu0 %v1739
    %1754 = vmatpush.msra.mxu0 %v1738
    %1755 = vmatpush.msra.mxu0 %v1737
    %1756 = vmatpush.msra.mxu0 %v1736
    %1757 = vmatpush.msra.mxu0 %v1735
    %1758 = vmatpush.msra.mxu0 %v1734
    %1759 = vmatpush.msra.mxu0 %v1733
    %1760 = vmatpush.msra.mxu0 %v1732
    %1761 = vmatpush.msra.mxu0 %v1731
    %1762 = vmatpush.msra.mxu0 %v1730
    %1763 = vmatpush.msra.mxu0 %v1729
    %1764 = vmatpush.msra.mxu0 %v1728
    %1765 = vmatmul.f32.gmra.mxu0 %v1712
    %v1766 = vpop.f32.mrf.mxu0
    %v1767 = vadd.f32 %v1747, %v1766
    %1768 = vmatmul.f32.gmra.mxu0 %v1713
    %v1769 = vpop.f32.mrf.mxu0
    %v1770 = vadd.f32 %v1747, %v1769
    %1771 = vmatmul.f32.gmra.mxu0 %v1714
    %v1772 = vpop.f32.mrf.mxu0
    %v1773 = vadd.f32 %v1747, %v1772
    %1774 = vmatmul.f32.gmra.mxu0 %v1715
    %v1775 = vpop.f32.mrf.mxu0
    %v1776 = vadd.f32 %v1747, %v1775
    %1777 = vmatmul.f32.gmra.mxu0 %v1716
    %v1778 = vpop.f32.mrf.mxu0
    %v1779 = vadd.f32 %v1747, %v1778
    %1780 = vmatmul.f32.gmra.mxu0 %v1717
    %v1781 = vpop.f32.mrf.mxu0
    %v1782 = vadd.f32 %v1747, %v1781
    %1783 = vmatmul.f32.gmra.mxu0 %v1718
    %v1784 = vpop.f32.mrf.mxu0
    %v1785 = vadd.f32 %v1747, %v1784
    %1786 = vmatmul.f32.gmra.mxu0 %v1719
    %v1787 = vpop.f32.mrf.mxu0
    %v1788 = vadd.f32 %v1747, %v1787
    %1789 = vmatmul.f32.gmra.mxu0 %v1720
    %v1790 = vpop.f32.mrf.mxu0
    %v1791 = vadd.f32 %v1747, %v1790
    %1792 = vmatmul.f32.gmra.mxu0 %v1721
    %v1793 = vpop.f32.mrf.mxu0
    %v1794 = vadd.f32 %v1747, %v1793
    %1795 = vmatmul.f32.gmra.mxu0 %v1722
    %v1796 = vpop.f32.mrf.mxu0
    %v1797 = vadd.f32 %v1747, %v1796
    %1798 = vmatmul.f32.gmra.mxu0 %v1723
    %v1799 = vpop.f32.mrf.mxu0
    %v1800 = vadd.f32 %v1747, %v1799
    %1801 = vmatmul.f32.gmra.mxu0 %v1724
    %v1802 = vpop.f32.mrf.mxu0
    %v1803 = vadd.f32 %v1747, %v1802
    %1804 = vmatmul.f32.gmra.mxu0 %v1725
    %v1805 = vpop.f32.mrf.mxu0
    %v1806 = vadd.f32 %v1747, %v1805
    %1807 = vmatmul.f32.gmra.mxu0 %v1726
    %v1808 = vpop.f32.mrf.mxu0
    %v1809 = vadd.f32 %v1747, %v1808
    %1810 = vmatmul.f32.gmra.mxu0 %v1727
    %v1811 = vpop.f32.mrf.mxu0
    %v1812 = vadd.f32 %v1747, %v1811
    %1813 = vdwg.mxu0
    %1814 = vst [vmem:[#allocation15] sm:$0xff] %v1767
    %1815 = vst [vmem:[#allocation15 + $0x8] sm:$0xff] %v1770
    %1816 = vst [vmem:[#allocation15 + $0x10] sm:$0xff] %v1773
    %1817 = vst [vmem:[#allocation15 + $0x18] sm:$0xff] %v1776
    %1818 = vst [vmem:[#allocation15 + $0x20] sm:$0xff] %v1779
    %1819 = vst [vmem:[#allocation15 + $0x28] sm:$0xff] %v1782
    %1820 = vst [vmem:[#allocation15 + $0x30] sm:$0xff] %v1785
    %1821 = vst [vmem:[#allocation15 + $0x38] sm:$0xff] %v1788
    %1822 = vst [vmem:[#allocation15 + $0x40] sm:$0xff] %v1791
    %1823 = vst [vmem:[#allocation15 + $0x48] sm:$0xff] %v1794
    %1824 = vst [vmem:[#allocation15 + $0x50] sm:$0xff] %v1797
    %1825 = vst [vmem:[#allocation15 + $0x58] sm:$0xff] %v1800
    %1826 = vst [vmem:[#allocation15 + $0x60] sm:$0xff] %v1803
    %1827 = vst [vmem:[#allocation15 + $0x68] sm:$0xff] %v1806
    %1828 = vst [vmem:[#allocation15 + $0x70] sm:$0xff] %v1809
    %1829 = vst [vmem:[#allocation15 + $0x78] sm:$0xff] %v1812
    // Predicated region
    $region94: #{tpu_custom_call.1} parent=1 // pred_check
      _
    $region95: #{tpu_custom_call.1} parent=1 // pred_check_branch
      %1831 = sbr.rel (0) target = $region97
    $region96: #{tpu_custom_call.1} parent=1 // pred_region
      %1833 = vsyncadd [#allocation5], 0
      %s1834 = sshll.u32 [#allocation15], 4
      %s1835 = int_to_ptr.vmem [resolvable:$true] %s1834
      %s1836 = sshll.u32 %s15, 4
      %s1837 = int_to_ptr.hbm [resolvable:$true] %s1836
      %1842 = dma.vmem_to_hbm [thread:$0]  %s1835, 2048, %s1837, [#allocation5], 128, 128, 8
    $region97: #{tpu_custom_call.1} parent=1 // pred_fallthru
      _
    // Predicated region
    $region98: #{tpu_custom_call.1} parent=1 // pred_check
      _
    $region99: #{tpu_custom_call.1} parent=1 // pred_check_branch
      %1844 = sbr.rel (0) target = $region101
    $region100: #{tpu_custom_call.1} parent=1 // pred_region
      %1846 = dma.done [#allocation5], 2048
    $region101: #{tpu_custom_call.1} parent=1 // pred_fallthru
      _
    %1847 = vsyncpa [#allocation4], 1
    %1848 = vsyncpa [#allocation7], 1
    %1849 = vsyncpa [#allocation10], 1
    %1850 = vsyncpa [#allocation13], 1
    %1851 = vsyncpa [#allocation5], 1

</llo_original>
